<compile_context>
chip_gen: v7x
topology: tpu7x:2x2x1
jax: 0.10.0
libtpu: 0.0.40
codegen_flags: <defaults>
</compile_context>

<pallas_src>
import functools

import jax
import jax.numpy as jnp
import numpy as np
from jax.experimental import pallas as pl
from jax.experimental.pallas import tpu as pltpu


# ----------------------------------------------------------------------------
# Fused kernel: all layers + time recurrence + final FC in one invocation.
# ----------------------------------------------------------------------------
def _fused_lstm_fc_kernel(x_ref, *refs, T, B, H, num_layers):
    # refs layout:
    #   [wih_0, whh_0, b_0, ..., wih_{L-1}, whh_{L-1}, b_{L-1},
    #    w_fc, b_fc, out_ref, seq_scratch]
    w_fc_ref = refs[3 * num_layers]
    b_fc_ref = refs[3 * num_layers + 1]
    out_ref = refs[3 * num_layers + 2]
    seq_ref = refs[3 * num_layers + 3]           # (T*B, H) f32 VMEM scratch

    inp_2d = x_ref[...]                          # (T*B, D_in) bf16, time-major

    h = None
    for l in range(num_layers):
        wih = refs[3 * l][...]                   # (D_in, 4H) bf16, g cols pre-scaled x2
        whh = refs[3 * l + 1][...]               # (H, 4H)    bf16, g cols pre-scaled x2
        bias = refs[3 * l + 2][...]              # (1, 4H)    f32, b_ih+b_hh, g cols x2

        # Hoisted input projection: all T steps in ONE MXU matmul, bias folded once
        # (single broadcast per layer instead of one per unrolled step).
        proj = (
            jnp.dot(inp_2d, wih, preferred_element_type=jnp.float32) + bias
        )                                        # (T*B, 4H) f32

        h = jnp.zeros((B, H), jnp.float32)
        c = jnp.zeros((B, H), jnp.float32)

        # Static unroll: T=8, H=32 is tiny and latency-bound; per-step chain is just
        # one (B,H)x(H,4H) matmul + one sigmoid + one tanh(c) + elementwise updates.
        for t in range(T):
            gates = proj[t * B:(t + 1) * B, :] + jnp.dot(
                h.astype(jnp.bfloat16), whh, preferred_element_type=jnp.float32
            )                                    # (B, 4H) f32, PyTorch gate order [i,f,g,o]
            # Single full-width EUP pass; tanh(g) recovered from it because the
            # g-gate columns were pre-scaled by 2:  tanh(g) = 2*sigmoid(2g) - 1.
            sig = jax.nn.sigmoid(gates)
            i_g = sig[:, 0 * H:1 * H]
            f_g = sig[:, 1 * H:2 * H]
            g_g = 2.0 * sig[:, 2 * H:3 * H] - 1.0
            o_g = sig[:, 3 * H:4 * H]
            c = f_g * c + i_g * g_g
            h = o_g * jnp.tanh(c)
            if l < num_layers - 1:
                # Stage this step's hidden state for the next layer's batched proj.
                seq_ref[t * B:(t + 1) * B, :] = h

        if l < num_layers - 1:
            inp_2d = seq_ref[...].astype(jnp.bfloat16)   # (T*B, H)

    # Final Linear(hidden, 1): VPU multiply + XLU lane reduction instead of a wasteful
    # 1-column MXU matmul at the epilogue.
    out = jnp.sum(h * w_fc_ref[...], axis=-1, keepdims=True) + b_fc_ref[...]
    out_ref[...] = out.astype(out_ref.dtype)


# ----------------------------------------------------------------------------
# Parameter construction (deterministic, mimics PyTorch uniform(-k, k) init).
# ----------------------------------------------------------------------------
def init_params(key, input_size, hidden, layers):
    k = 1.0 / np.sqrt(hidden)
    params = []
    for layer in range(layers):
        d_in = input_size if layer == 0 else hidden
        key, k1, k2, k3, k4 = jax.random.split(key, 5)
        w_ih = jax.random.uniform(k1, (4 * hidden, d_in), jnp.float32, -k, k)
        w_hh = jax.random.uniform(k2, (4 * hidden, hidden), jnp.float32, -k, k)
        b_ih = jax.random.uniform(k3, (4 * hidden,), jnp.float32, -k, k)
        b_hh = jax.random.uniform(k4, (4 * hidden,), jnp.float32, -k, k)
        params.append((w_ih, w_hh, b_ih, b_hh))
    key, k5, k6 = jax.random.split(key, 3)
    w_fc = jax.random.uniform(k5, (1, hidden), jnp.float32, -k, k)
    b_fc = jax.random.uniform(k6, (1,), jnp.float32, -k, k)
    return params, (w_fc, b_fc)


def prepare_params(lstm_params, fc_params):
    """One-time (outside jit) conversion from PyTorch layout to kernel layout.

    * W_ih^T (D_in,4H), W_hh^T (H,4H) in bf16 (MXU operands), b_ih+b_hh in f32 (1,4H).
    * ONLY the g-gate columns ([2H:3H]) of W_ih^T / W_hh^T / bias are scaled by 2 so
      the kernel can derive tanh(g) = 2*sigmoid(2g) - 1 from a single sigmoid pass.
    """
    layer_params = []
    for (w_ih, w_hh, b_ih, b_hh) in lstm_params:
        hidden = w_hh.shape[1]
        g_scale = (
            jnp.ones((1, 4 * hidden), jnp.float32)
            .at[:, 2 * hidden:3 * hidden]
            .set(2.0)
        )
        wih_t = (jnp.transpose(w_ih) * g_scale).astype(jnp.bfloat16)   # (D_in, 4H)
        whh_t = (jnp.transpose(w_hh) * g_scale).astype(jnp.bfloat16)   # (H, 4H)
        bias = (b_ih + b_hh).reshape(1, -1) * g_scale                  # (1, 4H) f32
        layer_params.append((wih_t, whh_t, bias))
    w_fc, b_fc = fc_params
    return layer_params, (
        w_fc.reshape(1, -1).astype(jnp.float32),    # (1, H) row for VPU dot
        b_fc.reshape(1, 1).astype(jnp.float32),     # (1, 1)
    )


# ----------------------------------------------------------------------------
# Forward pass (single Pallas call) and pure-JAX reference.
# ----------------------------------------------------------------------------
@functools.partial(jax.jit, static_argnums=(3,))
def lstm_forecaster_forward(x_btd, layer_params, fc_params, hidden):
    """x_btd: (B, T, input_size) batch-first, like the PyTorch module. Returns (B, 1)."""
    B, T, D = x_btd.shape
    num_layers = len(layer_params)

    # Time-major 2-D layout: hoisted layer-0 projection is a single matmul and each
    # step's precomputed gate slab is a contiguous sublane slice. Transposing 256
    # elements on the wrapper side is free.
    x_2d = jnp.transpose(x_btd, (1, 0, 2)).reshape(T * B, D).astype(jnp.bfloat16)

    flat_weights = []
    for (wih_t, whh_t, bias) in layer_params:
        flat_weights += [wih_t, whh_t, bias]
    w_fc_row, b_fc_2d = fc_params

    kernel = functools.partial(
        _fused_lstm_fc_kernel, T=T, B=B, H=hidden, num_layers=num_layers
    )
    n_inputs = 1 + 3 * num_layers + 2

    return pl.pallas_call(
        kernel,
        out_shape=jax.ShapeDtypeStruct((B, 1), jnp.float32),
        in_specs=[pl.BlockSpec(memory_space=pltpu.MemorySpace.VMEM)] * n_inputs,
        out_specs=pl.BlockSpec(memory_space=pltpu.MemorySpace.VMEM),
        scratch_shapes=[pltpu.VMEM((T * B, hidden), jnp.float32)],
        compiler_params=pltpu.CompilerParams(
            # Raise scoped-VMEM above the v5e 16 MiB default so the all-resident
            # design keeps compiling as H grows; harmless at these tiny sizes.
            vmem_limit_bytes=32 * 1024 * 1024,
        ),
    )(x_2d, *flat_weights, w_fc_row, b_fc_2d)


def lstm_forecaster_reference(x_btd, lstm_params, fc_params, hidden):
    h_in = x_btd.astype(jnp.float32)
    for (w_ih, w_hh, b_ih, b_hh) in lstm_params:
        B = h_in.shape[0]

        def step(carry, xt):
            h, c = carry
            gates = xt @ w_ih.T + b_ih + h @ w_hh.T + b_hh
            i_g, f_g, g_g, o_g = jnp.split(gates, 4, axis=-1)
            i_g = jax.nn.sigmoid(i_g)
            f_g = jax.nn.sigmoid(f_g)
            g_g = jnp.tanh(g_g)
            o_g = jax.nn.sigmoid(o_g)
            c = f_g * c + i_g * g_g
            h = o_g * jnp.tanh(c)
            return (h, c), h

        h0 = jnp.zeros((B, hidden), jnp.float32)
        c0 = jnp.zeros((B, hidden), jnp.float32)
        _, ys = jax.lax.scan(step, (h0, c0), jnp.swapaxes(h_in, 0, 1))
        h_in = jnp.swapaxes(ys, 0, 1)
    w_fc, b_fc = fc_params
    return h_in[:, -1] @ w_fc.T + b_fc


if __name__ == "__main__":
    # NOTE: B=2 fills only 2 of 8 sublanes; packing up to 8 (f32) / 16 (bf16)
    # sequences per call would scale throughput ~4-8x at ~no added latency.
    B, T, INPUT_SIZE, HIDDEN, LAYERS = 2, 8, 4, 32, 2

    key = jax.random.PRNGKey(0)
    key, xkey = jax.random.split(key)
    x = jax.random.normal(xkey, (B, T, INPUT_SIZE), jnp.float32)

    lstm_params, fc_params = init_params(key, INPUT_SIZE, HIDDEN, LAYERS)
    layer_params, fc_prepped = prepare_params(lstm_params, fc_params)  # once, outside jit

    out = lstm_forecaster_forward(x, layer_params, fc_prepped, HIDDEN)
    out = jax.block_until_ready(out)

    ref = lstm_forecaster_reference(x, lstm_params, fc_params, HIDDEN)
    # Tolerance loosened vs. the f32-only version because the kernel uses bf16 MXU
    # operands (f32 accumulation / state); see perf-review correctness note.
    np.testing.assert_allclose(np.asarray(out), np.asarray(ref), rtol=5e-2, atol=5e-2)
    assert out.shape == (B, 1)

    print("KERNEL_OK")
</pallas_src>

<mosaic_0001>
module attributes {stable_mosaic.version = 11 : i64} {
  func.func @_fused_lstm_fc_kernel(%arg0: memref<16x4xbf16, #tpu.memory_space<vmem>>, %arg1: memref<4x128xbf16, #tpu.memory_space<vmem>>, %arg2: memref<32x128xbf16, #tpu.memory_space<vmem>>, %arg3: memref<1x128xf32, #tpu.memory_space<vmem>>, %arg4: memref<32x128xbf16, #tpu.memory_space<vmem>>, %arg5: memref<32x128xbf16, #tpu.memory_space<vmem>>, %arg6: memref<1x128xf32, #tpu.memory_space<vmem>>, %arg7: memref<1x32xf32, #tpu.memory_space<vmem>>, %arg8: memref<1x1xf32, #tpu.memory_space<vmem>>, %arg9: memref<2x1xf32, #tpu.memory_space<vmem>>, %arg10: memref<16x32xf32, #tpu.memory_space<vmem>>) attributes {dimension_semantics = [], scalar_prefetch = 0 : i64, scratch_operands = 1 : i64, tpu.core_type = #tpu.core_type<tc>} {
    %c0 = arith.constant 0 : index
    %c0_0 = arith.constant 0 : index
    %0 = vector.load %arg0[%c0, %c0_0] : memref<16x4xbf16, #tpu.memory_space<vmem>>, vector<16x4xbf16>
    %c0_1 = arith.constant 0 : index
    %c0_2 = arith.constant 0 : index
    %1 = vector.load %arg1[%c0_1, %c0_2] : memref<4x128xbf16, #tpu.memory_space<vmem>>, vector<4x128xbf16>
    %c0_3 = arith.constant 0 : index
    %c0_4 = arith.constant 0 : index
    %2 = vector.load %arg2[%c0_3, %c0_4] : memref<32x128xbf16, #tpu.memory_space<vmem>>, vector<32x128xbf16>
    %c0_5 = arith.constant 0 : index
    %c0_6 = arith.constant 0 : index
    %3 = vector.load %arg3[%c0_5, %c0_6] : memref<1x128xf32, #tpu.memory_space<vmem>>, vector<1x128xf32>
    %cst = arith.constant dense<0.000000e+00> : vector<16x128xf32>
    %4 = tpu.matmul %0, %1, %cst {dimension_numbers = #tpu.dot_dimension_numbers<[1], [0], [0], [1], [0, 0, 1, 1], [], []>} : vector<16x4xbf16>, vector<4x128xbf16>, vector<16x128xf32> -> vector<16x128xf32>
    %5 = vector.broadcast %3 : vector<1x128xf32> to vector<16x128xf32>
    %6 = arith.addf %4, %5 : vector<16x128xf32>
    %cst_7 = arith.constant 0.000000e+00 : f32
    %7 = vector.broadcast %cst_7 : f32 to vector<2x32xf32>
    %cst_8 = arith.constant 0.000000e+00 : f32
    %8 = vector.broadcast %cst_8 : f32 to vector<2x32xf32>
    %9 = vector.extract_strided_slice %6 {offsets = [0, 0], sizes = [2, 128], strides = [1, 1]} : vector<16x128xf32> to vector<2x128xf32>
    %10 = arith.truncf %7 : vector<2x32xf32> to vector<2x32xbf16>
    %cst_9 = arith.constant dense<0.000000e+00> : vector<2x128xf32>
    %11 = tpu.matmul %10, %2, %cst_9 {dimension_numbers = #tpu.dot_dimension_numbers<[1], [0], [0], [1], [0, 0, 1, 1], [], []>} : vector<2x32xbf16>, vector<32x128xbf16>, vector<2x128xf32> -> vector<2x128xf32>
    %12 = arith.addf %9, %11 : vector<2x128xf32>
    %13 = arith.negf %12 : vector<2x128xf32>
    %14 = math.exp %13 : vector<2x128xf32>
    %cst_10 = arith.constant 1.000000e+00 : f32
    %15 = vector.broadcast %cst_10 : f32 to vector<2x128xf32>
    %16 = arith.addf %15, %14 : vector<2x128xf32>
    %17 = arith.divf %15, %16 : vector<2x128xf32>
    %18 = vector.extract_strided_slice %17 {offsets = [0, 0], sizes = [2, 32], strides = [1, 1]} : vector<2x128xf32> to vector<2x32xf32>
    %19 = vector.extract_strided_slice %17 {offsets = [0, 32], sizes = [2, 32], strides = [1, 1]} : vector<2x128xf32> to vector<2x32xf32>
    %20 = vector.extract_strided_slice %17 {offsets = [0, 64], sizes = [2, 32], strides = [1, 1]} : vector<2x128xf32> to vector<2x32xf32>
    %cst_11 = arith.constant 2.000000e+00 : f32
    %21 = vector.broadcast %cst_11 : f32 to vector<2x32xf32>
    %22 = arith.mulf %21, %20 : vector<2x32xf32>
    %cst_12 = arith.constant 1.000000e+00 : f32
    %23 = vector.broadcast %cst_12 : f32 to vector<2x32xf32>
    %24 = arith.subf %22, %23 : vector<2x32xf32>
    %25 = vector.extract_strided_slice %17 {offsets = [0, 96], sizes = [2, 32], strides = [1, 1]} : vector<2x128xf32> to vector<2x32xf32>
    %26 = arith.mulf %19, %8 : vector<2x32xf32>
    %27 = arith.mulf %18, %24 : vector<2x32xf32>
    %28 = arith.addf %26, %27 : vector<2x32xf32>
    %29 = math.tanh %28 : vector<2x32xf32>
    %30 = arith.mulf %25, %29 : vector<2x32xf32>
    %c0_13 = arith.constant 0 : index
    %c0_14 = arith.constant 0 : index
    %31 = vector.load %arg10[%c0_13, %c0_14] : memref<16x32xf32, #tpu.memory_space<vmem>>, vector<2x32xf32>
    tpu.vector_store %arg10[%c0_13, %c0_14], %30 {strides = array<i32>} : memref<16x32xf32, #tpu.memory_space<vmem>>, vector<2x32xf32>,
    %32 = vector.extract_strided_slice %6 {offsets = [2, 0], sizes = [2, 128], strides = [1, 1]} : vector<16x128xf32> to vector<2x128xf32>
    %33 = arith.truncf %30 : vector<2x32xf32> to vector<2x32xbf16>
    %cst_15 = arith.constant dense<0.000000e+00> : vector<2x128xf32>
    %34 = tpu.matmul %33, %2, %cst_15 {dimension_numbers = #tpu.dot_dimension_numbers<[1], [0], [0], [1], [0, 0, 1, 1], [], []>} : vector<2x32xbf16>, vector<32x128xbf16>, vector<2x128xf32> -> vector<2x128xf32>
    %35 = arith.addf %32, %34 : vector<2x128xf32>
    %36 = arith.negf %35 : vector<2x128xf32>
    %37 = math.exp %36 : vector<2x128xf32>
    %cst_16 = arith.constant 1.000000e+00 : f32
    %38 = vector.broadcast %cst_16 : f32 to vector<2x128xf32>
    %39 = arith.addf %38, %37 : vector<2x128xf32>
    %40 = arith.divf %38, %39 : vector<2x128xf32>
    %41 = vector.extract_strided_slice %40 {offsets = [0, 0], sizes = [2, 32], strides = [1, 1]} : vector<2x128xf32> to vector<2x32xf32>
    %42 = vector.extract_strided_slice %40 {offsets = [0, 32], sizes = [2, 32], strides = [1, 1]} : vector<2x128xf32> to vector<2x32xf32>
    %43 = vector.extract_strided_slice %40 {offsets = [0, 64], sizes = [2, 32], strides = [1, 1]} : vector<2x128xf32> to vector<2x32xf32>
    %cst_17 = arith.constant 2.000000e+00 : f32
    %44 = vector.broadcast %cst_17 : f32 to vector<2x32xf32>
    %45 = arith.mulf %44, %43 : vector<2x32xf32>
    %cst_18 = arith.constant 1.000000e+00 : f32
    %46 = vector.broadcast %cst_18 : f32 to vector<2x32xf32>
    %47 = arith.subf %45, %46 : vector<2x32xf32>
    %48 = vector.extract_strided_slice %40 {offsets = [0, 96], sizes = [2, 32], strides = [1, 1]} : vector<2x128xf32> to vector<2x32xf32>
    %49 = arith.mulf %42, %28 : vector<2x32xf32>
    %50 = arith.mulf %41, %47 : vector<2x32xf32>
    %51 = arith.addf %49, %50 : vector<2x32xf32>
    %52 = math.tanh %51 : vector<2x32xf32>
    %53 = arith.mulf %48, %52 : vector<2x32xf32>
    %c2 = arith.constant 2 : index
    %c0_19 = arith.constant 0 : index
    %54 = vector.load %arg10[%c2, %c0_19] : memref<16x32xf32, #tpu.memory_space<vmem>>, vector<2x32xf32>
    tpu.vector_store %arg10[%c2, %c0_19], %53 {strides = array<i32>} : memref<16x32xf32, #tpu.memory_space<vmem>>, vector<2x32xf32>,
    %55 = vector.extract_strided_slice %6 {offsets = [4, 0], sizes = [2, 128], strides = [1, 1]} : vector<16x128xf32> to vector<2x128xf32>
    %56 = arith.truncf %53 : vector<2x32xf32> to vector<2x32xbf16>
    %cst_20 = arith.constant dense<0.000000e+00> : vector<2x128xf32>
    %57 = tpu.matmul %56, %2, %cst_20 {dimension_numbers = #tpu.dot_dimension_numbers<[1], [0], [0], [1], [0, 0, 1, 1], [], []>} : vector<2x32xbf16>, vector<32x128xbf16>, vector<2x128xf32> -> vector<2x128xf32>
    %58 = arith.addf %55, %57 : vector<2x128xf32>
    %59 = arith.negf %58 : vector<2x128xf32>
    %60 = math.exp %59 : vector<2x128xf32>
    %cst_21 = arith.constant 1.000000e+00 : f32
    %61 = vector.broadcast %cst_21 : f32 to vector<2x128xf32>
    %62 = arith.addf %61, %60 : vector<2x128xf32>
    %63 = arith.divf %61, %62 : vector<2x128xf32>
    %64 = vector.extract_strided_slice %63 {offsets = [0, 0], sizes = [2, 32], strides = [1, 1]} : vector<2x128xf32> to vector<2x32xf32>
    %65 = vector.extract_strided_slice %63 {offsets = [0, 32], sizes = [2, 32], strides = [1, 1]} : vector<2x128xf32> to vector<2x32xf32>
    %66 = vector.extract_strided_slice %63 {offsets = [0, 64], sizes = [2, 32], strides = [1, 1]} : vector<2x128xf32> to vector<2x32xf32>
    %cst_22 = arith.constant 2.000000e+00 : f32
    %67 = vector.broadcast %cst_22 : f32 to vector<2x32xf32>
    %68 = arith.mulf %67, %66 : vector<2x32xf32>
    %cst_23 = arith.constant 1.000000e+00 : f32
    %69 = vector.broadcast %cst_23 : f32 to vector<2x32xf32>
    %70 = arith.subf %68, %69 : vector<2x32xf32>
    %71 = vector.extract_strided_slice %63 {offsets = [0, 96], sizes = [2, 32], strides = [1, 1]} : vector<2x128xf32> to vector<2x32xf32>
    %72 = arith.mulf %65, %51 : vector<2x32xf32>
    %73 = arith.mulf %64, %70 : vector<2x32xf32>
    %74 = arith.addf %72, %73 : vector<2x32xf32>
    %75 = math.tanh %74 : vector<2x32xf32>
    %76 = arith.mulf %71, %75 : vector<2x32xf32>
    %c4 = arith.constant 4 : index
    %c0_24 = arith.constant 0 : index
    %77 = vector.load %arg10[%c4, %c0_24] : memref<16x32xf32, #tpu.memory_space<vmem>>, vector<2x32xf32>
    tpu.vector_store %arg10[%c4, %c0_24], %76 {strides = array<i32>} : memref<16x32xf32, #tpu.memory_space<vmem>>, vector<2x32xf32>,
    %78 = vector.extract_strided_slice %6 {offsets = [6, 0], sizes = [2, 128], strides = [1, 1]} : vector<16x128xf32> to vector<2x128xf32>
    %79 = arith.truncf %76 : vector<2x32xf32> to vector<2x32xbf16>
    %cst_25 = arith.constant dense<0.000000e+00> : vector<2x128xf32>
    %80 = tpu.matmul %79, %2, %cst_25 {dimension_numbers = #tpu.dot_dimension_numbers<[1], [0], [0], [1], [0, 0, 1, 1], [], []>} : vector<2x32xbf16>, vector<32x128xbf16>, vector<2x128xf32> -> vector<2x128xf32>
    %81 = arith.addf %78, %80 : vector<2x128xf32>
    %82 = arith.negf %81 : vector<2x128xf32>
    %83 = math.exp %82 : vector<2x128xf32>
    %cst_26 = arith.constant 1.000000e+00 : f32
    %84 = vector.broadcast %cst_26 : f32 to vector<2x128xf32>
    %85 = arith.addf %84, %83 : vector<2x128xf32>
    %86 = arith.divf %84, %85 : vector<2x128xf32>
    %87 = vector.extract_strided_slice %86 {offsets = [0, 0], sizes = [2, 32], strides = [1, 1]} : vector<2x128xf32> to vector<2x32xf32>
    %88 = vector.extract_strided_slice %86 {offsets = [0, 32], sizes = [2, 32], strides = [1, 1]} : vector<2x128xf32> to vector<2x32xf32>
    %89 = vector.extract_strided_slice %86 {offsets = [0, 64], sizes = [2, 32], strides = [1, 1]} : vector<2x128xf32> to vector<2x32xf32>
    %cst_27 = arith.constant 2.000000e+00 : f32
    %90 = vector.broadcast %cst_27 : f32 to vector<2x32xf32>
    %91 = arith.mulf %90, %89 : vector<2x32xf32>
    %cst_28 = arith.constant 1.000000e+00 : f32
    %92 = vector.broadcast %cst_28 : f32 to vector<2x32xf32>
    %93 = arith.subf %91, %92 : vector<2x32xf32>
    %94 = vector.extract_strided_slice %86 {offsets = [0, 96], sizes = [2, 32], strides = [1, 1]} : vector<2x128xf32> to vector<2x32xf32>
    %95 = arith.mulf %88, %74 : vector<2x32xf32>
    %96 = arith.mulf %87, %93 : vector<2x32xf32>
    %97 = arith.addf %95, %96 : vector<2x32xf32>
    %98 = math.tanh %97 : vector<2x32xf32>
    %99 = arith.mulf %94, %98 : vector<2x32xf32>
    %c6 = arith.constant 6 : index
    %c0_29 = arith.constant 0 : index
    %100 = vector.load %arg10[%c6, %c0_29] : memref<16x32xf32, #tpu.memory_space<vmem>>, vector<2x32xf32>
    tpu.vector_store %arg10[%c6, %c0_29], %99 {strides = array<i32>} : memref<16x32xf32, #tpu.memory_space<vmem>>, vector<2x32xf32>,
    %101 = vector.extract_strided_slice %6 {offsets = [8, 0], sizes = [2, 128], strides = [1, 1]} : vector<16x128xf32> to vector<2x128xf32>
    %102 = arith.truncf %99 : vector<2x32xf32> to vector<2x32xbf16>
    %cst_30 = arith.constant dense<0.000000e+00> : vector<2x128xf32>
    %103 = tpu.matmul %102, %2, %cst_30 {dimension_numbers = #tpu.dot_dimension_numbers<[1], [0], [0], [1], [0, 0, 1, 1], [], []>} : vector<2x32xbf16>, vector<32x128xbf16>, vector<2x128xf32> -> vector<2x128xf32>
    %104 = arith.addf %101, %103 : vector<2x128xf32>
    %105 = arith.negf %104 : vector<2x128xf32>
    %106 = math.exp %105 : vector<2x128xf32>
    %cst_31 = arith.constant 1.000000e+00 : f32
    %107 = vector.broadcast %cst_31 : f32 to vector<2x128xf32>
    %108 = arith.addf %107, %106 : vector<2x128xf32>
    %109 = arith.divf %107, %108 : vector<2x128xf32>
    %110 = vector.extract_strided_slice %109 {offsets = [0, 0], sizes = [2, 32], strides = [1, 1]} : vector<2x128xf32> to vector<2x32xf32>
    %111 = vector.extract_strided_slice %109 {offsets = [0, 32], sizes = [2, 32], strides = [1, 1]} : vector<2x128xf32> to vector<2x32xf32>
    %112 = vector.extract_strided_slice %109 {offsets = [0, 64], sizes = [2, 32], strides = [1, 1]} : vector<2x128xf32> to vector<2x32xf32>
    %cst_32 = arith.constant 2.000000e+00 : f32
    %113 = vector.broadcast %cst_32 : f32 to vector<2x32xf32>
    %114 = arith.mulf %113, %112 : vector<2x32xf32>
    %cst_33 = arith.constant 1.000000e+00 : f32
    %115 = vector.broadcast %cst_33 : f32 to vector<2x32xf32>
    %116 = arith.subf %114, %115 : vector<2x32xf32>
    %117 = vector.extract_strided_slice %109 {offsets = [0, 96], sizes = [2, 32], strides = [1, 1]} : vector<2x128xf32> to vector<2x32xf32>
    %118 = arith.mulf %111, %97 : vector<2x32xf32>
    %119 = arith.mulf %110, %116 : vector<2x32xf32>
    %120 = arith.addf %118, %119 : vector<2x32xf32>
    %121 = math.tanh %120 : vector<2x32xf32>
    %122 = arith.mulf %117, %121 : vector<2x32xf32>
    %c8 = arith.constant 8 : index
    %c0_34 = arith.constant 0 : index
    %123 = vector.load %arg10[%c8, %c0_34] : memref<16x32xf32, #tpu.memory_space<vmem>>, vector<2x32xf32>
    tpu.vector_store %arg10[%c8, %c0_34], %122 {strides = array<i32>} : memref<16x32xf32, #tpu.memory_space<vmem>>, vector<2x32xf32>,
    %124 = vector.extract_strided_slice %6 {offsets = [10, 0], sizes = [2, 128], strides = [1, 1]} : vector<16x128xf32> to vector<2x128xf32>
    %125 = arith.truncf %122 : vector<2x32xf32> to vector<2x32xbf16>
    %cst_35 = arith.constant dense<0.000000e+00> : vector<2x128xf32>
    %126 = tpu.matmul %125, %2, %cst_35 {dimension_numbers = #tpu.dot_dimension_numbers<[1], [0], [0], [1], [0, 0, 1, 1], [], []>} : vector<2x32xbf16>, vector<32x128xbf16>, vector<2x128xf32> -> vector<2x128xf32>
    %127 = arith.addf %124, %126 : vector<2x128xf32>
    %128 = arith.negf %127 : vector<2x128xf32>
    %129 = math.exp %128 : vector<2x128xf32>
    %cst_36 = arith.constant 1.000000e+00 : f32
    %130 = vector.broadcast %cst_36 : f32 to vector<2x128xf32>
    %131 = arith.addf %130, %129 : vector<2x128xf32>
    %132 = arith.divf %130, %131 : vector<2x128xf32>
    %133 = vector.extract_strided_slice %132 {offsets = [0, 0], sizes = [2, 32], strides = [1, 1]} : vector<2x128xf32> to vector<2x32xf32>
    %134 = vector.extract_strided_slice %132 {offsets = [0, 32], sizes = [2, 32], strides = [1, 1]} : vector<2x128xf32> to vector<2x32xf32>
    %135 = vector.extract_strided_slice %132 {offsets = [0, 64], sizes = [2, 32], strides = [1, 1]} : vector<2x128xf32> to vector<2x32xf32>
    %cst_37 = arith.constant 2.000000e+00 : f32
    %136 = vector.broadcast %cst_37 : f32 to vector<2x32xf32>
    %137 = arith.mulf %136, %135 : vector<2x32xf32>
    %cst_38 = arith.constant 1.000000e+00 : f32
    %138 = vector.broadcast %cst_38 : f32 to vector<2x32xf32>
    %139 = arith.subf %137, %138 : vector<2x32xf32>
    %140 = vector.extract_strided_slice %132 {offsets = [0, 96], sizes = [2, 32], strides = [1, 1]} : vector<2x128xf32> to vector<2x32xf32>
    %141 = arith.mulf %134, %120 : vector<2x32xf32>
    %142 = arith.mulf %133, %139 : vector<2x32xf32>
    %143 = arith.addf %141, %142 : vector<2x32xf32>
    %144 = math.tanh %143 : vector<2x32xf32>
    %145 = arith.mulf %140, %144 : vector<2x32xf32>
    %c10 = arith.constant 10 : index
    %c0_39 = arith.constant 0 : index
    %146 = vector.load %arg10[%c10, %c0_39] : memref<16x32xf32, #tpu.memory_space<vmem>>, vector<2x32xf32>
    tpu.vector_store %arg10[%c10, %c0_39], %145 {strides = array<i32>} : memref<16x32xf32, #tpu.memory_space<vmem>>, vector<2x32xf32>,
    %147 = vector.extract_strided_slice %6 {offsets = [12, 0], sizes = [2, 128], strides = [1, 1]} : vector<16x128xf32> to vector<2x128xf32>
    %148 = arith.truncf %145 : vector<2x32xf32> to vector<2x32xbf16>
    %cst_40 = arith.constant dense<0.000000e+00> : vector<2x128xf32>
    %149 = tpu.matmul %148, %2, %cst_40 {dimension_numbers = #tpu.dot_dimension_numbers<[1], [0], [0], [1], [0, 0, 1, 1], [], []>} : vector<2x32xbf16>, vector<32x128xbf16>, vector<2x128xf32> -> vector<2x128xf32>
    %150 = arith.addf %147, %149 : vector<2x128xf32>
    %151 = arith.negf %150 : vector<2x128xf32>
    %152 = math.exp %151 : vector<2x128xf32>
    %cst_41 = arith.constant 1.000000e+00 : f32
    %153 = vector.broadcast %cst_41 : f32 to vector<2x128xf32>
    %154 = arith.addf %153, %152 : vector<2x128xf32>
    %155 = arith.divf %153, %154 : vector<2x128xf32>
    %156 = vector.extract_strided_slice %155 {offsets = [0, 0], sizes = [2, 32], strides = [1, 1]} : vector<2x128xf32> to vector<2x32xf32>
    %157 = vector.extract_strided_slice %155 {offsets = [0, 32], sizes = [2, 32], strides = [1, 1]} : vector<2x128xf32> to vector<2x32xf32>
    %158 = vector.extract_strided_slice %155 {offsets = [0, 64], sizes = [2, 32], strides = [1, 1]} : vector<2x128xf32> to vector<2x32xf32>
    %cst_42 = arith.constant 2.000000e+00 : f32
    %159 = vector.broadcast %cst_42 : f32 to vector<2x32xf32>
    %160 = arith.mulf %159, %158 : vector<2x32xf32>
    %cst_43 = arith.constant 1.000000e+00 : f32
    %161 = vector.broadcast %cst_43 : f32 to vector<2x32xf32>
    %162 = arith.subf %160, %161 : vector<2x32xf32>
    %163 = vector.extract_strided_slice %155 {offsets = [0, 96], sizes = [2, 32], strides = [1, 1]} : vector<2x128xf32> to vector<2x32xf32>
    %164 = arith.mulf %157, %143 : vector<2x32xf32>
    %165 = arith.mulf %156, %162 : vector<2x32xf32>
    %166 = arith.addf %164, %165 : vector<2x32xf32>
    %167 = math.tanh %166 : vector<2x32xf32>
    %168 = arith.mulf %163, %167 : vector<2x32xf32>
    %c12 = arith.constant 12 : index
    %c0_44 = arith.constant 0 : index
    %169 = vector.load %arg10[%c12, %c0_44] : memref<16x32xf32, #tpu.memory_space<vmem>>, vector<2x32xf32>
    tpu.vector_store %arg10[%c12, %c0_44], %168 {strides = array<i32>} : memref<16x32xf32, #tpu.memory_space<vmem>>, vector<2x32xf32>,
    %170 = vector.extract_strided_slice %6 {offsets = [14, 0], sizes = [2, 128], strides = [1, 1]} : vector<16x128xf32> to vector<2x128xf32>
    %171 = arith.truncf %168 : vector<2x32xf32> to vector<2x32xbf16>
    %cst_45 = arith.constant dense<0.000000e+00> : vector<2x128xf32>
    %172 = tpu.matmul %171, %2, %cst_45 {dimension_numbers = #tpu.dot_dimension_numbers<[1], [0], [0], [1], [0, 0, 1, 1], [], []>} : vector<2x32xbf16>, vector<32x128xbf16>, vector<2x128xf32> -> vector<2x128xf32>
    %173 = arith.addf %170, %172 : vector<2x128xf32>
    %174 = arith.negf %173 : vector<2x128xf32>
    %175 = math.exp %174 : vector<2x128xf32>
    %cst_46 = arith.constant 1.000000e+00 : f32
    %176 = vector.broadcast %cst_46 : f32 to vector<2x128xf32>
    %177 = arith.addf %176, %175 : vector<2x128xf32>
    %178 = arith.divf %176, %177 : vector<2x128xf32>
    %179 = vector.extract_strided_slice %178 {offsets = [0, 0], sizes = [2, 32], strides = [1, 1]} : vector<2x128xf32> to vector<2x32xf32>
    %180 = vector.extract_strided_slice %178 {offsets = [0, 32], sizes = [2, 32], strides = [1, 1]} : vector<2x128xf32> to vector<2x32xf32>
    %181 = vector.extract_strided_slice %178 {offsets = [0, 64], sizes = [2, 32], strides = [1, 1]} : vector<2x128xf32> to vector<2x32xf32>
    %cst_47 = arith.constant 2.000000e+00 : f32
    %182 = vector.broadcast %cst_47 : f32 to vector<2x32xf32>
    %183 = arith.mulf %182, %181 : vector<2x32xf32>
    %cst_48 = arith.constant 1.000000e+00 : f32
    %184 = vector.broadcast %cst_48 : f32 to vector<2x32xf32>
    %185 = arith.subf %183, %184 : vector<2x32xf32>
    %186 = vector.extract_strided_slice %178 {offsets = [0, 96], sizes = [2, 32], strides = [1, 1]} : vector<2x128xf32> to vector<2x32xf32>
    %187 = arith.mulf %180, %166 : vector<2x32xf32>
    %188 = arith.mulf %179, %185 : vector<2x32xf32>
    %189 = arith.addf %187, %188 : vector<2x32xf32>
    %190 = math.tanh %189 : vector<2x32xf32>
    %191 = arith.mulf %186, %190 : vector<2x32xf32>
    %c14 = arith.constant 14 : index
    %c0_49 = arith.constant 0 : index
    %192 = vector.load %arg10[%c14, %c0_49] : memref<16x32xf32, #tpu.memory_space<vmem>>, vector<2x32xf32>
    tpu.vector_store %arg10[%c14, %c0_49], %191 {strides = array<i32>} : memref<16x32xf32, #tpu.memory_space<vmem>>, vector<2x32xf32>,
    %c0_50 = arith.constant 0 : index
    %c0_51 = arith.constant 0 : index
    %193 = vector.load %arg10[%c0_50, %c0_51] : memref<16x32xf32, #tpu.memory_space<vmem>>, vector<16x32xf32>
    %194 = arith.truncf %193 : vector<16x32xf32> to vector<16x32xbf16>
    %c0_52 = arith.constant 0 : index
    %c0_53 = arith.constant 0 : index
    %195 = vector.load %arg4[%c0_52, %c0_53] : memref<32x128xbf16, #tpu.memory_space<vmem>>, vector<32x128xbf16>
    %c0_54 = arith.constant 0 : index
    %c0_55 = arith.constant 0 : index
    %196 = vector.load %arg5[%c0_54, %c0_55] : memref<32x128xbf16, #tpu.memory_space<vmem>>, vector<32x128xbf16>
    %c0_56 = arith.constant 0 : index
    %c0_57 = arith.constant 0 : index
    %197 = vector.load %arg6[%c0_56, %c0_57] : memref<1x128xf32, #tpu.memory_space<vmem>>, vector<1x128xf32>
    %cst_58 = arith.constant dense<0.000000e+00> : vector<16x128xf32>
    %198 = tpu.matmul %194, %195, %cst_58 {dimension_numbers = #tpu.dot_dimension_numbers<[1], [0], [0], [1], [0, 0, 1, 1], [], []>} : vector<16x32xbf16>, vector<32x128xbf16>, vector<16x128xf32> -> vector<16x128xf32>
    %199 = vector.broadcast %197 : vector<1x128xf32> to vector<16x128xf32>
    %200 = arith.addf %198, %199 : vector<16x128xf32>
    %cst_59 = arith.constant 0.000000e+00 : f32
    %201 = vector.broadcast %cst_59 : f32 to vector<2x32xf32>
    %cst_60 = arith.constant 0.000000e+00 : f32
    %202 = vector.broadcast %cst_60 : f32 to vector<2x32xf32>
    %203 = vector.extract_strided_slice %200 {offsets = [0, 0], sizes = [2, 128], strides = [1, 1]} : vector<16x128xf32> to vector<2x128xf32>
    %204 = arith.truncf %201 : vector<2x32xf32> to vector<2x32xbf16>
    %cst_61 = arith.constant dense<0.000000e+00> : vector<2x128xf32>
    %205 = tpu.matmul %204, %196, %cst_61 {dimension_numbers = #tpu.dot_dimension_numbers<[1], [0], [0], [1], [0, 0, 1, 1], [], []>} : vector<2x32xbf16>, vector<32x128xbf16>, vector<2x128xf32> -> vector<2x128xf32>
    %206 = arith.addf %203, %205 : vector<2x128xf32>
    %207 = arith.negf %206 : vector<2x128xf32>
    %208 = math.exp %207 : vector<2x128xf32>
    %cst_62 = arith.constant 1.000000e+00 : f32
    %209 = vector.broadcast %cst_62 : f32 to vector<2x128xf32>
    %210 = arith.addf %209, %208 : vector<2x128xf32>
    %211 = arith.divf %209, %210 : vector<2x128xf32>
    %212 = vector.extract_strided_slice %211 {offsets = [0, 0], sizes = [2, 32], strides = [1, 1]} : vector<2x128xf32> to vector<2x32xf32>
    %213 = vector.extract_strided_slice %211 {offsets = [0, 32], sizes = [2, 32], strides = [1, 1]} : vector<2x128xf32> to vector<2x32xf32>
    %214 = vector.extract_strided_slice %211 {offsets = [0, 64], sizes = [2, 32], strides = [1, 1]} : vector<2x128xf32> to vector<2x32xf32>
    %cst_63 = arith.constant 2.000000e+00 : f32
    %215 = vector.broadcast %cst_63 : f32 to vector<2x32xf32>
    %216 = arith.mulf %215, %214 : vector<2x32xf32>
    %cst_64 = arith.constant 1.000000e+00 : f32
    %217 = vector.broadcast %cst_64 : f32 to vector<2x32xf32>
    %218 = arith.subf %216, %217 : vector<2x32xf32>
    %219 = vector.extract_strided_slice %211 {offsets = [0, 96], sizes = [2, 32], strides = [1, 1]} : vector<2x128xf32> to vector<2x32xf32>
    %220 = arith.mulf %213, %202 : vector<2x32xf32>
    %221 = arith.mulf %212, %218 : vector<2x32xf32>
    %222 = arith.addf %220, %221 : vector<2x32xf32>
    %223 = math.tanh %222 : vector<2x32xf32>
    %224 = arith.mulf %219, %223 : vector<2x32xf32>
    %225 = vector.extract_strided_slice %200 {offsets = [2, 0], sizes = [2, 128], strides = [1, 1]} : vector<16x128xf32> to vector<2x128xf32>
    %226 = arith.truncf %224 : vector<2x32xf32> to vector<2x32xbf16>
    %cst_65 = arith.constant dense<0.000000e+00> : vector<2x128xf32>
    %227 = tpu.matmul %226, %196, %cst_65 {dimension_numbers = #tpu.dot_dimension_numbers<[1], [0], [0], [1], [0, 0, 1, 1], [], []>} : vector<2x32xbf16>, vector<32x128xbf16>, vector<2x128xf32> -> vector<2x128xf32>
    %228 = arith.addf %225, %227 : vector<2x128xf32>
    %229 = arith.negf %228 : vector<2x128xf32>
    %230 = math.exp %229 : vector<2x128xf32>
    %cst_66 = arith.constant 1.000000e+00 : f32
    %231 = vector.broadcast %cst_66 : f32 to vector<2x128xf32>
    %232 = arith.addf %231, %230 : vector<2x128xf32>
    %233 = arith.divf %231, %232 : vector<2x128xf32>
    %234 = vector.extract_strided_slice %233 {offsets = [0, 0], sizes = [2, 32], strides = [1, 1]} : vector<2x128xf32> to vector<2x32xf32>
    %235 = vector.extract_strided_slice %233 {offsets = [0, 32], sizes = [2, 32], strides = [1, 1]} : vector<2x128xf32> to vector<2x32xf32>
    %236 = vector.extract_strided_slice %233 {offsets = [0, 64], sizes = [2, 32], strides = [1, 1]} : vector<2x128xf32> to vector<2x32xf32>
    %cst_67 = arith.constant 2.000000e+00 : f32
    %237 = vector.broadcast %cst_67 : f32 to vector<2x32xf32>
    %238 = arith.mulf %237, %236 : vector<2x32xf32>
    %cst_68 = arith.constant 1.000000e+00 : f32
    %239 = vector.broadcast %cst_68 : f32 to vector<2x32xf32>
    %240 = arith.subf %238, %239 : vector<2x32xf32>
    %241 = vector.extract_strided_slice %233 {offsets = [0, 96], sizes = [2, 32], strides = [1, 1]} : vector<2x128xf32> to vector<2x32xf32>
    %242 = arith.mulf %235, %222 : vector<2x32xf32>
    %243 = arith.mulf %234, %240 : vector<2x32xf32>
    %244 = arith.addf %242, %243 : vector<2x32xf32>
    %245 = math.tanh %244 : vector<2x32xf32>
    %246 = arith.mulf %241, %245 : vector<2x32xf32>
    %247 = vector.extract_strided_slice %200 {offsets = [4, 0], sizes = [2, 128], strides = [1, 1]} : vector<16x128xf32> to vector<2x128xf32>
    %248 = arith.truncf %246 : vector<2x32xf32> to vector<2x32xbf16>
    %cst_69 = arith.constant dense<0.000000e+00> : vector<2x128xf32>
    %249 = tpu.matmul %248, %196, %cst_69 {dimension_numbers = #tpu.dot_dimension_numbers<[1], [0], [0], [1], [0, 0, 1, 1], [], []>} : vector<2x32xbf16>, vector<32x128xbf16>, vector<2x128xf32> -> vector<2x128xf32>
    %250 = arith.addf %247, %249 : vector<2x128xf32>
    %251 = arith.negf %250 : vector<2x128xf32>
    %252 = math.exp %251 : vector<2x128xf32>
    %cst_70 = arith.constant 1.000000e+00 : f32
    %253 = vector.broadcast %cst_70 : f32 to vector<2x128xf32>
    %254 = arith.addf %253, %252 : vector<2x128xf32>
    %255 = arith.divf %253, %254 : vector<2x128xf32>
    %256 = vector.extract_strided_slice %255 {offsets = [0, 0], sizes = [2, 32], strides = [1, 1]} : vector<2x128xf32> to vector<2x32xf32>
    %257 = vector.extract_strided_slice %255 {offsets = [0, 32], sizes = [2, 32], strides = [1, 1]} : vector<2x128xf32> to vector<2x32xf32>
    %258 = vector.extract_strided_slice %255 {offsets = [0, 64], sizes = [2, 32], strides = [1, 1]} : vector<2x128xf32> to vector<2x32xf32>
    %cst_71 = arith.constant 2.000000e+00 : f32
    %259 = vector.broadcast %cst_71 : f32 to vector<2x32xf32>
    %260 = arith.mulf %259, %258 : vector<2x32xf32>
    %cst_72 = arith.constant 1.000000e+00 : f32
    %261 = vector.broadcast %cst_72 : f32 to vector<2x32xf32>
    %262 = arith.subf %260, %261 : vector<2x32xf32>
    %263 = vector.extract_strided_slice %255 {offsets = [0, 96], sizes = [2, 32], strides = [1, 1]} : vector<2x128xf32> to vector<2x32xf32>
    %264 = arith.mulf %257, %244 : vector<2x32xf32>
    %265 = arith.mulf %256, %262 : vector<2x32xf32>
    %266 = arith.addf %264, %265 : vector<2x32xf32>
    %267 = math.tanh %266 : vector<2x32xf32>
    %268 = arith.mulf %263, %267 : vector<2x32xf32>
    %269 = vector.extract_strided_slice %200 {offsets = [6, 0], sizes = [2, 128], strides = [1, 1]} : vector<16x128xf32> to vector<2x128xf32>
    %270 = arith.truncf %268 : vector<2x32xf32> to vector<2x32xbf16>
    %cst_73 = arith.constant dense<0.000000e+00> : vector<2x128xf32>
    %271 = tpu.matmul %270, %196, %cst_73 {dimension_numbers = #tpu.dot_dimension_numbers<[1], [0], [0], [1], [0, 0, 1, 1], [], []>} : vector<2x32xbf16>, vector<32x128xbf16>, vector<2x128xf32> -> vector<2x128xf32>
    %272 = arith.addf %269, %271 : vector<2x128xf32>
    %273 = arith.negf %272 : vector<2x128xf32>
    %274 = math.exp %273 : vector<2x128xf32>
    %cst_74 = arith.constant 1.000000e+00 : f32
    %275 = vector.broadcast %cst_74 : f32 to vector<2x128xf32>
    %276 = arith.addf %275, %274 : vector<2x128xf32>
    %277 = arith.divf %275, %276 : vector<2x128xf32>
    %278 = vector.extract_strided_slice %277 {offsets = [0, 0], sizes = [2, 32], strides = [1, 1]} : vector<2x128xf32> to vector<2x32xf32>
    %279 = vector.extract_strided_slice %277 {offsets = [0, 32], sizes = [2, 32], strides = [1, 1]} : vector<2x128xf32> to vector<2x32xf32>
    %280 = vector.extract_strided_slice %277 {offsets = [0, 64], sizes = [2, 32], strides = [1, 1]} : vector<2x128xf32> to vector<2x32xf32>
    %cst_75 = arith.constant 2.000000e+00 : f32
    %281 = vector.broadcast %cst_75 : f32 to vector<2x32xf32>
    %282 = arith.mulf %281, %280 : vector<2x32xf32>
    %cst_76 = arith.constant 1.000000e+00 : f32
    %283 = vector.broadcast %cst_76 : f32 to vector<2x32xf32>
    %284 = arith.subf %282, %283 : vector<2x32xf32>
    %285 = vector.extract_strided_slice %277 {offsets = [0, 96], sizes = [2, 32], strides = [1, 1]} : vector<2x128xf32> to vector<2x32xf32>
    %286 = arith.mulf %279, %266 : vector<2x32xf32>
    %287 = arith.mulf %278, %284 : vector<2x32xf32>
    %288 = arith.addf %286, %287 : vector<2x32xf32>
    %289 = math.tanh %288 : vector<2x32xf32>
    %290 = arith.mulf %285, %289 : vector<2x32xf32>
    %291 = vector.extract_strided_slice %200 {offsets = [8, 0], sizes = [2, 128], strides = [1, 1]} : vector<16x128xf32> to vector<2x128xf32>
    %292 = arith.truncf %290 : vector<2x32xf32> to vector<2x32xbf16>
    %cst_77 = arith.constant dense<0.000000e+00> : vector<2x128xf32>
    %293 = tpu.matmul %292, %196, %cst_77 {dimension_numbers = #tpu.dot_dimension_numbers<[1], [0], [0], [1], [0, 0, 1, 1], [], []>} : vector<2x32xbf16>, vector<32x128xbf16>, vector<2x128xf32> -> vector<2x128xf32>
    %294 = arith.addf %291, %293 : vector<2x128xf32>
    %295 = arith.negf %294 : vector<2x128xf32>
    %296 = math.exp %295 : vector<2x128xf32>
    %cst_78 = arith.constant 1.000000e+00 : f32
    %297 = vector.broadcast %cst_78 : f32 to vector<2x128xf32>
    %298 = arith.addf %297, %296 : vector<2x128xf32>
    %299 = arith.divf %297, %298 : vector<2x128xf32>
    %300 = vector.extract_strided_slice %299 {offsets = [0, 0], sizes = [2, 32], strides = [1, 1]} : vector<2x128xf32> to vector<2x32xf32>
    %301 = vector.extract_strided_slice %299 {offsets = [0, 32], sizes = [2, 32], strides = [1, 1]} : vector<2x128xf32> to vector<2x32xf32>
    %302 = vector.extract_strided_slice %299 {offsets = [0, 64], sizes = [2, 32], strides = [1, 1]} : vector<2x128xf32> to vector<2x32xf32>
    %cst_79 = arith.constant 2.000000e+00 : f32
    %303 = vector.broadcast %cst_79 : f32 to vector<2x32xf32>
    %304 = arith.mulf %303, %302 : vector<2x32xf32>
    %cst_80 = arith.constant 1.000000e+00 : f32
    %305 = vector.broadcast %cst_80 : f32 to vector<2x32xf32>
    %306 = arith.subf %304, %305 : vector<2x32xf32>
    %307 = vector.extract_strided_slice %299 {offsets = [0, 96], sizes = [2, 32], strides = [1, 1]} : vector<2x128xf32> to vector<2x32xf32>
    %308 = arith.mulf %301, %288 : vector<2x32xf32>
    %309 = arith.mulf %300, %306 : vector<2x32xf32>
    %310 = arith.addf %308, %309 : vector<2x32xf32>
    %311 = math.tanh %310 : vector<2x32xf32>
    %312 = arith.mulf %307, %311 : vector<2x32xf32>
    %313 = vector.extract_strided_slice %200 {offsets = [10, 0], sizes = [2, 128], strides = [1, 1]} : vector<16x128xf32> to vector<2x128xf32>
    %314 = arith.truncf %312 : vector<2x32xf32> to vector<2x32xbf16>
    %cst_81 = arith.constant dense<0.000000e+00> : vector<2x128xf32>
    %315 = tpu.matmul %314, %196, %cst_81 {dimension_numbers = #tpu.dot_dimension_numbers<[1], [0], [0], [1], [0, 0, 1, 1], [], []>} : vector<2x32xbf16>, vector<32x128xbf16>, vector<2x128xf32> -> vector<2x128xf32>
    %316 = arith.addf %313, %315 : vector<2x128xf32>
    %317 = arith.negf %316 : vector<2x128xf32>
    %318 = math.exp %317 : vector<2x128xf32>
    %cst_82 = arith.constant 1.000000e+00 : f32
    %319 = vector.broadcast %cst_82 : f32 to vector<2x128xf32>
    %320 = arith.addf %319, %318 : vector<2x128xf32>
    %321 = arith.divf %319, %320 : vector<2x128xf32>
    %322 = vector.extract_strided_slice %321 {offsets = [0, 0], sizes = [2, 32], strides = [1, 1]} : vector<2x128xf32> to vector<2x32xf32>
    %323 = vector.extract_strided_slice %321 {offsets = [0, 32], sizes = [2, 32], strides = [1, 1]} : vector<2x128xf32> to vector<2x32xf32>
    %324 = vector.extract_strided_slice %321 {offsets = [0, 64], sizes = [2, 32], strides = [1, 1]} : vector<2x128xf32> to vector<2x32xf32>
    %cst_83 = arith.constant 2.000000e+00 : f32
    %325 = vector.broadcast %cst_83 : f32 to vector<2x32xf32>
    %326 = arith.mulf %325, %324 : vector<2x32xf32>
    %cst_84 = arith.constant 1.000000e+00 : f32
    %327 = vector.broadcast %cst_84 : f32 to vector<2x32xf32>
    %328 = arith.subf %326, %327 : vector<2x32xf32>
    %329 = vector.extract_strided_slice %321 {offsets = [0, 96], sizes = [2, 32], strides = [1, 1]} : vector<2x128xf32> to vector<2x32xf32>
    %330 = arith.mulf %323, %310 : vector<2x32xf32>
    %331 = arith.mulf %322, %328 : vector<2x32xf32>
    %332 = arith.addf %330, %331 : vector<2x32xf32>
    %333 = math.tanh %332 : vector<2x32xf32>
    %334 = arith.mulf %329, %333 : vector<2x32xf32>
    %335 = vector.extract_strided_slice %200 {offsets = [12, 0], sizes = [2, 128], strides = [1, 1]} : vector<16x128xf32> to vector<2x128xf32>
    %336 = arith.truncf %334 : vector<2x32xf32> to vector<2x32xbf16>
    %cst_85 = arith.constant dense<0.000000e+00> : vector<2x128xf32>
    %337 = tpu.matmul %336, %196, %cst_85 {dimension_numbers = #tpu.dot_dimension_numbers<[1], [0], [0], [1], [0, 0, 1, 1], [], []>} : vector<2x32xbf16>, vector<32x128xbf16>, vector<2x128xf32> -> vector<2x128xf32>
    %338 = arith.addf %335, %337 : vector<2x128xf32>
    %339 = arith.negf %338 : vector<2x128xf32>
    %340 = math.exp %339 : vector<2x128xf32>
    %cst_86 = arith.constant 1.000000e+00 : f32
    %341 = vector.broadcast %cst_86 : f32 to vector<2x128xf32>
    %342 = arith.addf %341, %340 : vector<2x128xf32>
    %343 = arith.divf %341, %342 : vector<2x128xf32>
    %344 = vector.extract_strided_slice %343 {offsets = [0, 0], sizes = [2, 32], strides = [1, 1]} : vector<2x128xf32> to vector<2x32xf32>
    %345 = vector.extract_strided_slice %343 {offsets = [0, 32], sizes = [2, 32], strides = [1, 1]} : vector<2x128xf32> to vector<2x32xf32>
    %346 = vector.extract_strided_slice %343 {offsets = [0, 64], sizes = [2, 32], strides = [1, 1]} : vector<2x128xf32> to vector<2x32xf32>
    %cst_87 = arith.constant 2.000000e+00 : f32
    %347 = vector.broadcast %cst_87 : f32 to vector<2x32xf32>
    %348 = arith.mulf %347, %346 : vector<2x32xf32>
    %cst_88 = arith.constant 1.000000e+00 : f32
    %349 = vector.broadcast %cst_88 : f32 to vector<2x32xf32>
    %350 = arith.subf %348, %349 : vector<2x32xf32>
    %351 = vector.extract_strided_slice %343 {offsets = [0, 96], sizes = [2, 32], strides = [1, 1]} : vector<2x128xf32> to vector<2x32xf32>
    %352 = arith.mulf %345, %332 : vector<2x32xf32>
    %353 = arith.mulf %344, %350 : vector<2x32xf32>
    %354 = arith.addf %352, %353 : vector<2x32xf32>
    %355 = math.tanh %354 : vector<2x32xf32>
    %356 = arith.mulf %351, %355 : vector<2x32xf32>
    %357 = vector.extract_strided_slice %200 {offsets = [14, 0], sizes = [2, 128], strides = [1, 1]} : vector<16x128xf32> to vector<2x128xf32>
    %358 = arith.truncf %356 : vector<2x32xf32> to vector<2x32xbf16>
    %cst_89 = arith.constant dense<0.000000e+00> : vector<2x128xf32>
    %359 = tpu.matmul %358, %196, %cst_89 {dimension_numbers = #tpu.dot_dimension_numbers<[1], [0], [0], [1], [0, 0, 1, 1], [], []>} : vector<2x32xbf16>, vector<32x128xbf16>, vector<2x128xf32> -> vector<2x128xf32>
    %360 = arith.addf %357, %359 : vector<2x128xf32>
    %361 = arith.negf %360 : vector<2x128xf32>
    %362 = math.exp %361 : vector<2x128xf32>
    %cst_90 = arith.constant 1.000000e+00 : f32
    %363 = vector.broadcast %cst_90 : f32 to vector<2x128xf32>
    %364 = arith.addf %363, %362 : vector<2x128xf32>
    %365 = arith.divf %363, %364 : vector<2x128xf32>
    %366 = vector.extract_strided_slice %365 {offsets = [0, 0], sizes = [2, 32], strides = [1, 1]} : vector<2x128xf32> to vector<2x32xf32>
    %367 = vector.extract_strided_slice %365 {offsets = [0, 32], sizes = [2, 32], strides = [1, 1]} : vector<2x128xf32> to vector<2x32xf32>
    %368 = vector.extract_strided_slice %365 {offsets = [0, 64], sizes = [2, 32], strides = [1, 1]} : vector<2x128xf32> to vector<2x32xf32>
    %cst_91 = arith.constant 2.000000e+00 : f32
    %369 = vector.broadcast %cst_91 : f32 to vector<2x32xf32>
    %370 = arith.mulf %369, %368 : vector<2x32xf32>
    %cst_92 = arith.constant 1.000000e+00 : f32
    %371 = vector.broadcast %cst_92 : f32 to vector<2x32xf32>
    %372 = arith.subf %370, %371 : vector<2x32xf32>
    %373 = vector.extract_strided_slice %365 {offsets = [0, 96], sizes = [2, 32], strides = [1, 1]} : vector<2x128xf32> to vector<2x32xf32>
    %374 = arith.mulf %367, %354 : vector<2x32xf32>
    %375 = arith.mulf %366, %372 : vector<2x32xf32>
    %376 = arith.addf %374, %375 : vector<2x32xf32>
    %377 = math.tanh %376 : vector<2x32xf32>
    %378 = arith.mulf %373, %377 : vector<2x32xf32>
    %c0_93 = arith.constant 0 : index
    %c0_94 = arith.constant 0 : index
    %379 = vector.load %arg7[%c0_93, %c0_94] : memref<1x32xf32, #tpu.memory_space<vmem>>, vector<1x32xf32>
    %380 = vector.broadcast %379 : vector<1x32xf32> to vector<2x32xf32>
    %381 = arith.mulf %378, %380 : vector<2x32xf32>
    %cst_95 = arith.constant dense<0.000000e+00> : vector<2xf32>
    %382 = vector.multi_reduction <add>, %381, %cst_95 [1] : vector<2x32xf32> to vector<2xf32>
    %383 = vector.shape_cast %382 : vector<2xf32> to vector<2x1xf32>
    %c0_96 = arith.constant 0 : index
    %c0_97 = arith.constant 0 : index
    %384 = vector.load %arg8[%c0_96, %c0_97] : memref<1x1xf32, #tpu.memory_space<vmem>>, vector<1x1xf32>
    %385 = vector.broadcast %384 : vector<1x1xf32> to vector<2x1xf32>
    %386 = arith.addf %383, %385 : vector<2x1xf32>
    %c0_98 = arith.constant 0 : index
    %c0_99 = arith.constant 0 : index
    %387 = vector.load %arg9[%c0_98, %c0_99] : memref<2x1xf32, #tpu.memory_space<vmem>>, vector<2x1xf32>
    tpu.vector_store %arg9[%c0_98, %c0_99], %386 {strides = array<i32>} : memref<2x1xf32, #tpu.memory_space<vmem>>, vector<2x1xf32>,
    return
  }
}

</mosaic_0001>

<llo_original>
// kernel: lstm_forecaster_forward.1
$region0: #{lstm_forecaster_forward.1}
  #allocation0 [shape = 'u32[]', space=smem, size = 0x4, offset = 0x4, fixed_abs, tag = 'smem constant byte address 0x4 - core index']
  #allocation1 [shape = 'u32[144,128]{1,0:T(1,128)}', space=vmem, size = 0x12000, scoped, tag = 'internal scratch']
  #allocation2 [shape = 'f32[16,32]{1,0:T(8,128)}', space=vmem, size = 0x2000, scoped, tag = 'scratch operand']
  #allocation3 [shape = 'f32[1,1]{1,0:T(1,128)S(1)}', space=vmem, size = 0x200, scoped, tag = 'scoped memory for lstm_forecaster_forward.1']
  %s0 = inlined_call_operand.vmem [shape: bf16[16,4], index: 0, kind: input, shape index: {}]
  %s1 = inlined_call_operand.vmem [shape: bf16[4,128], index: 1, kind: input, shape index: {}]
  %s2 = inlined_call_operand.vmem [shape: bf16[32,128], index: 2, kind: input, shape index: {}]
  %s3 = inlined_call_operand.vmem [shape: f32[1,128], index: 3, kind: input, shape index: {}]
  %s4 = inlined_call_operand.vmem [shape: bf16[32,128], index: 4, kind: input, shape index: {}]
  %s5 = inlined_call_operand.hbm [shape: bf16[32,128], index: 5, kind: input, shape index: {}]
  %s6 = inlined_call_operand.hbm [shape: f32[1,128], index: 6, kind: input, shape index: {}]
  %s7 = inlined_call_operand.vmem [shape: f32[1,32], index: 7, kind: input, shape index: {}]
  %s8 = inlined_call_operand.<no memory space> [shape: f32[1,1], index: 8, kind: input, shape index: {}]
  %s9 = inlined_call_operand.vmem [shape: f32[2,1], index: 9, kind: output, shape index: {}]
  %s10 = sld [smem:[#allocation0]]
  $region54: #{lstm_forecaster_forward.1} parent=0
    _
  %s12 = ssub.s32 1, %s10
  %s13 = scalar_select 0, %s12, %s10
  %v14 = vstv %s8
  %15 = vst [vmem:[#allocation3] sm:$0x1] %v14
  $region1: #{lstm_forecaster_forward.1} parent=0
    #allocation4 [shape = 'u8[8192]{0}', space=vmem, size = 0x2000, scoped, tag = 'input window, operand 5, single buffered']
    #allocation5 [shape = 's32[1]{0}', space=sflag, size = 0x4, scoped, tag = 'scoped memory for lstm_forecaster_forward.1']
    #allocation6 [shape = 'u8[512]{0}', space=vmem, size = 0x400, scoped, tag = 'input window, operand 6, single buffered']
    #allocation7 [shape = 's32[1]{0}', space=sflag, size = 0x4, scoped, tag = 'scoped memory for lstm_forecaster_forward.1']
    %16 = vsyncpa [#allocation5], 0
    %17 = vsyncpa [#allocation7], 0
    // Predicated region
    $region2: #{lstm_forecaster_forward.1} parent=1 // pred_check
      _
    $region3: #{lstm_forecaster_forward.1} parent=1 // pred_check_branch
      %19 = sbr.rel (0) target = $region5
    $region4: #{lstm_forecaster_forward.1} parent=1 // pred_region
      _
    $region5: #{lstm_forecaster_forward.1} parent=1 // pred_fallthru
      _
    // Predicated region
    $region6: #{lstm_forecaster_forward.1} parent=1 // pred_check
      _
    $region7: #{lstm_forecaster_forward.1} parent=1 // pred_check_branch
      %21 = sbr.rel (0) target = $region9
    $region8: #{lstm_forecaster_forward.1} parent=1 // pred_region
      _
    $region9: #{lstm_forecaster_forward.1} parent=1 // pred_fallthru
      _
    // Predicated region
    $region10: #{lstm_forecaster_forward.1} parent=1 // pred_check
      _
    $region11: #{lstm_forecaster_forward.1} parent=1 // pred_check_branch
      %23 = sbr.rel (0) target = $region13
    $region12: #{lstm_forecaster_forward.1} parent=1 // pred_region
      _
    $region13: #{lstm_forecaster_forward.1} parent=1 // pred_fallthru
      _
    // Predicated region
    $region14: #{lstm_forecaster_forward.1} parent=1 // pred_check
      _
    $region15: #{lstm_forecaster_forward.1} parent=1 // pred_check_branch
      %25 = sbr.rel (0) target = $region17
    $region16: #{lstm_forecaster_forward.1} parent=1 // pred_region
      _
    $region17: #{lstm_forecaster_forward.1} parent=1 // pred_fallthru
      _
    // Predicated region
    $region18: #{lstm_forecaster_forward.1} parent=1 // pred_check
      _
    $region19: #{lstm_forecaster_forward.1} parent=1 // pred_check_branch
      %27 = sbr.rel (0) target = $region21
    $region20: #{lstm_forecaster_forward.1} parent=1 // pred_region
      _
    $region21: #{lstm_forecaster_forward.1} parent=1 // pred_fallthru
      _
    // Predicated region
    $region22: #{lstm_forecaster_forward.1} parent=1 // pred_check
      _
    $region23: #{lstm_forecaster_forward.1} parent=1 // pred_check_branch
      %29 = sbr.rel (0) target = $region25
    $region24: #{lstm_forecaster_forward.1} parent=1 // pred_region
      %s31 = ssub.s32 256, 256
      %32 = vsyncadd [#allocation5], %s31
      %s33 = sshll.u32 [#allocation4], 4
      %s34 = int_to_ptr.vmem [resolvable:$true] %s33
      %39 = dma.hbm_to_vmem [thread:$0]  %s5, 256, %s34, [#allocation5], 64, 64, 4
    $region25: #{lstm_forecaster_forward.1} parent=1 // pred_fallthru
      _
    // Predicated region
    $region26: #{lstm_forecaster_forward.1} parent=1 // pred_check
      _
    $region27: #{lstm_forecaster_forward.1} parent=1 // pred_check_branch
      %41 = sbr.rel (0) target = $region29
    $region28: #{lstm_forecaster_forward.1} parent=1 // pred_region
      %s43 = ssub.s32 16, 16
      %44 = vsyncadd [#allocation7], %s43
      %s46 = sshll.u32 [#allocation6], 4
      %s47 = int_to_ptr.vmem [resolvable:$true] %s46
      %49 = dma.hbm_to_vmem [thread:$0]  %s6, 16, %s47, [#allocation7]
    $region29: #{lstm_forecaster_forward.1} parent=1 // pred_fallthru
      _
    // Predicated region
    $region30: #{lstm_forecaster_forward.1} parent=1 // pred_check
      _
    $region31: #{lstm_forecaster_forward.1} parent=1 // pred_check_branch
      %51 = sbr.rel (0) target = $region33
    $region32: #{lstm_forecaster_forward.1} parent=1 // pred_region
      _
    $region33: #{lstm_forecaster_forward.1} parent=1 // pred_fallthru
      _
    // Predicated region
    $region34: #{lstm_forecaster_forward.1} parent=1 // pred_check
      _
    $region35: #{lstm_forecaster_forward.1} parent=1 // pred_check_branch
      %53 = sbr.rel (0) target = $region37
    $region36: #{lstm_forecaster_forward.1} parent=1 // pred_region
      _
    $region37: #{lstm_forecaster_forward.1} parent=1 // pred_fallthru
      _
    // Predicated region
    $region38: #{lstm_forecaster_forward.1} parent=1 // pred_check
      _
    $region39: #{lstm_forecaster_forward.1} parent=1 // pred_check_branch
      %55 = sbr.rel (0) target = $region41
    $region40: #{lstm_forecaster_forward.1} parent=1 // pred_region
      %56 = dma.done [#allocation5], 256
    $region41: #{lstm_forecaster_forward.1} parent=1 // pred_fallthru
      _
    // Predicated region
    $region42: #{lstm_forecaster_forward.1} parent=1 // pred_check
      _
    $region43: #{lstm_forecaster_forward.1} parent=1 // pred_check_branch
      %58 = sbr.rel (0) target = $region45
    $region44: #{lstm_forecaster_forward.1} parent=1 // pred_region
      %59 = dma.done [#allocation7], 16
    $region45: #{lstm_forecaster_forward.1} parent=1 // pred_fallthru
      _
    %v61 = vld [vmem:[%s0] sm:$0xf]
    %v62 = vld [vmem:[%s0 + $0x4] sm:$0xf]
    %v63 = vld [vmem:[%s1] sm:$0x3]
    %v64 = vld [vmem:[%s2] sm:$0xf]
    %v65 = vld [vmem:[%s2 + $0x4] sm:$0xf]
    %v66 = vld [vmem:[%s2 + $0x8] sm:$0xf]
    %v67 = vld [vmem:[%s2 + $0xc] sm:$0xf]
    %v68 = vld [vmem:[%s3] sm:$0x1]
    %v70 = vlaneseq
    %v71 = vshrl.u32 %v70, 7
    %v72 = vsub.s32 0, %v71
    %v73 = vrot.slane %v68, %v72
    %v77 = vunpack.c.l.b16 %v61
    %v78 = vunpack.c.l.b16 %v62
    %v79 = vpack.c.b16 %v78, %v77
    %vm80 = vcmask 31744
    %v82 = vsel %vm80, %v79, 0
    %vm84 = vcmask 1041408
    %v86 = vsel %vm84, %v63, 0
    %88 = vmatprep.subr.bf16.mxu0 0
    %89 = vmatpush1.bf16.msra.mxu0 %v86
    %90 = vmatprep.subr.bf16.mxu0 0
    %91 = vmatpush1.bf16.msra.mxu0 0
    %92 = vmatprep.subr.bf16.mxu0 0
    %93 = vmatpush1.bf16.msra.mxu0 0
    %94 = vmatprep.subr.bf16.mxu0 0
    %95 = vmatpush1.bf16.msra.mxu0 0
    %96 = vmatprep.subr.bf16.mxu0 0
    %97 = vmatpush1.bf16.msra.mxu0 0
    %98 = vmatprep.subr.bf16.mxu0 0
    %99 = vmatpush1.bf16.msra.mxu0 0
    %100 = vmatprep.subr.bf16.mxu0 0
    %101 = vmatpush1.bf16.msra.mxu0 0
    %102 = vmatprep.subr.bf16.mxu0 0
    %103 = vmatpush1.bf16.msra.mxu0 0
    %104 = vmatprep.subr.bf16.mxu0 0
    %105 = vmatpush1.bf16.msra.mxu0 0
    %106 = vmatprep.subr.bf16.mxu0 0
    %107 = vmatpush1.bf16.msra.mxu0 0
    %108 = vmatprep.subr.bf16.mxu0 0
    %109 = vmatpush1.bf16.msra.mxu0 0
    %110 = vmatprep.subr.bf16.mxu0 0
    %111 = vmatpush1.bf16.msra.mxu0 0
    %112 = vmatprep.subr.bf16.mxu0 0
    %113 = vmatpush1.bf16.msra.mxu0 0
    %114 = vmatprep.subr.bf16.mxu0 0
    %115 = vmatpush1.bf16.msra.mxu0 0
    %116 = vmatprep.subr.bf16.mxu0 0
    %117 = vmatpush1.bf16.msra.mxu0 0
    %118 = vmatprep.subr.bf16.mxu0 0
    %119 = vmatpush1.bf16.msra.mxu0 0
    %120 = vmatprep.mubr.bf16.mxu0 0
    %121 = vmatmul.mubr.bf16.gmra.mrb[0].mxu0 %v82
    %v122 = vpop.f32.mrb[0].mxu0
    %v123 = vadd.f32 %v73, %v122
    %v124 = vpop.f32.mrb[0].mxu0
    %v125 = vpop.f32.mrb[0].mxu0
    %v126 = vadd.f32 %v73, %v125
    %v127 = vpop.f32.mrb[0].mxu0
    %128 = vdwg.mxu0
    %v133 = vunpack.c.l.b16 %v64
    %v134 = vunpack.c.l.b16 %v65
    %v135 = vunpack.c.l.b16 %v66
    %v136 = vunpack.c.l.b16 %v67
    %v137 = vpack.c.b16 %v134, %v133
    %v138 = vpack.c.b16 %v136, %v135
    %vm141 = vcmask 261120
    %v143 = vsel %vm141, 0, 0
    %145 = vmatprep.subr.bf16.mxu0 0
    %146 = vmatpush1.bf16.msra.mxu0 %v137
    %147 = vmatprep.subr.bf16.mxu0 0
    %148 = vmatpush1.bf16.msra.mxu0 %v138
    %149 = vmatprep.subr.bf16.mxu0 0
    %150 = vmatpush1.bf16.msra.mxu0 0
    %151 = vmatprep.subr.bf16.mxu0 0
    %152 = vmatpush1.bf16.msra.mxu0 0
    %153 = vmatprep.subr.bf16.mxu0 0
    %154 = vmatpush1.bf16.msra.mxu0 0
    %155 = vmatprep.subr.bf16.mxu0 0
    %156 = vmatpush1.bf16.msra.mxu0 0
    %157 = vmatprep.subr.bf16.mxu0 0
    %158 = vmatpush1.bf16.msra.mxu0 0
    %159 = vmatprep.subr.bf16.mxu0 0
    %160 = vmatpush1.bf16.msra.mxu0 0
    %161 = vmatprep.subr.bf16.mxu0 0
    %162 = vmatpush1.bf16.msra.mxu0 0
    %163 = vmatprep.subr.bf16.mxu0 0
    %164 = vmatpush1.bf16.msra.mxu0 0
    %165 = vmatprep.subr.bf16.mxu0 0
    %166 = vmatpush1.bf16.msra.mxu0 0
    %167 = vmatprep.subr.bf16.mxu0 0
    %168 = vmatpush1.bf16.msra.mxu0 0
    %169 = vmatprep.subr.bf16.mxu0 0
    %170 = vmatpush1.bf16.msra.mxu0 0
    %171 = vmatprep.subr.bf16.mxu0 0
    %172 = vmatpush1.bf16.msra.mxu0 0
    %173 = vmatprep.subr.bf16.mxu0 0
    %174 = vmatpush1.bf16.msra.mxu0 0
    %175 = vmatprep.subr.bf16.mxu0 0
    %176 = vmatpush1.bf16.msra.mxu0 0
    %177 = vmatprep.mubr.bf16.mxu0 0
    %178 = vmatmul.mubr.bf16.gmra.mrb[0].mxu0 %v143
    %v179 = vpop.f32.mrb[0].mxu0
    %v180 = vadd.f32 0.0, %v179
    %v181 = vpop.f32.mrb[0].mxu0
    %v182 = vpop.f32.mrb[0].mxu0
    %v183 = vpop.f32.mrb[0].mxu0
    %184 = vdwg.mxu0
    %v185 = vadd.f32 %v123, %v180
    %v186 = vxor.u32 %v185, 2147483648
    %v187 = vmul.f32 %v186, 1.442695
    %v188 = vpow.pop %v187
    %v189 = vadd.f32 %v188, 1.0
    %v190 = vrcp.pop %v189
    %v191 = vmul.f32 1.0, %v190
    %v192 = vmul.f32 %v191, 2.0
    %v193 = vsub.f32 %v192, 1.0
    %v194 = vmul.f32 %v191, 0.0
    %196 = vrot.lane.b32.xlu0 %v193, 64
    %v197 = vpop.permute.xlu0 %196
    %v199 = vmul.f32 %v191, %v197
    %201 = vrot.lane.b32.xlu0 %v199, 32
    %v202 = vpop.permute.xlu0 %201
    %v204 = vadd.f32 %v194, %v202
    %v205 = vtanh.pop %v204
    %207 = vrot.lane.b32.xlu0 %v205, 64
    %v208 = vpop.permute.xlu0 %207
    %v210 = vmul.f32 %v191, %v208
    %212 = vrot.lane.b32.xlu0 %v210, 32
    %v213 = vpop.permute.xlu0 %212
    %vm215 = vcmask 254976
    %216 = vst.msk [vmem:[#allocation2] sm:$0x3] %vm215, %v213
    %v217 = vpack.c.bf16 %v210, %v210
    %219 = vrot.lane.b32.xlu0 %v217, 32
    %v220 = vpop.permute.xlu0 %219
    %v222 = vsel %vm141, %v220, 0
    %224 = vmatprep.subr.bf16.mxu0 0
    %225 = vmatpush1.bf16.msra.mxu0 %v137
    %226 = vmatprep.subr.bf16.mxu0 0
    %227 = vmatpush1.bf16.msra.mxu0 %v138
    %228 = vmatprep.subr.bf16.mxu0 0
    %229 = vmatpush1.bf16.msra.mxu0 0
    %230 = vmatprep.subr.bf16.mxu0 0
    %231 = vmatpush1.bf16.msra.mxu0 0
    %232 = vmatprep.subr.bf16.mxu0 0
    %233 = vmatpush1.bf16.msra.mxu0 0
    %234 = vmatprep.subr.bf16.mxu0 0
    %235 = vmatpush1.bf16.msra.mxu0 0
    %236 = vmatprep.subr.bf16.mxu0 0
    %237 = vmatpush1.bf16.msra.mxu0 0
    %238 = vmatprep.subr.bf16.mxu0 0
    %239 = vmatpush1.bf16.msra.mxu0 0
    %240 = vmatprep.subr.bf16.mxu0 0
    %241 = vmatpush1.bf16.msra.mxu0 0
    %242 = vmatprep.subr.bf16.mxu0 0
    %243 = vmatpush1.bf16.msra.mxu0 0
    %244 = vmatprep.subr.bf16.mxu0 0
    %245 = vmatpush1.bf16.msra.mxu0 0
    %246 = vmatprep.subr.bf16.mxu0 0
    %247 = vmatpush1.bf16.msra.mxu0 0
    %248 = vmatprep.subr.bf16.mxu0 0
    %249 = vmatpush1.bf16.msra.mxu0 0
    %250 = vmatprep.subr.bf16.mxu0 0
    %251 = vmatpush1.bf16.msra.mxu0 0
    %252 = vmatprep.subr.bf16.mxu0 0
    %253 = vmatpush1.bf16.msra.mxu0 0
    %254 = vmatprep.subr.bf16.mxu0 0
    %255 = vmatpush1.bf16.msra.mxu0 0
    %256 = vmatprep.mubr.bf16.mxu0 0
    %257 = vmatmul.mubr.bf16.gmra.mrb[0].mxu0 %v222
    %v258 = vpop.f32.mrb[0].mxu0
    %v259 = vadd.f32 0.0, %v258
    %v260 = vpop.f32.mrb[0].mxu0
    %v261 = vpop.f32.mrb[0].mxu0
    %v262 = vpop.f32.mrb[0].mxu0
    %263 = vdwg.mxu0
    %v265 = vrot.slane %v259, 6
    %v267 = vadd.f32 %v123, %v265
    %v268 = vxor.u32 %v267, 2147483648
    %v269 = vmul.f32 %v268, 1.442695
    %v270 = vpow.pop %v269
    %v271 = vadd.f32 %v270, 1.0
    %v272 = vrcp.pop %v271
    %v273 = vmul.f32 1.0, %v272
    %v274 = vmul.f32 %v273, 2.0
    %v275 = vsub.f32 %v274, 1.0
    %v277 = vrot.slane %v204, 6
    %v279 = vmul.f32 %v273, %v277
    %281 = vrot.lane.b32.xlu0 %v275, 64
    %v282 = vpop.permute.xlu0 %281
    %v284 = vmul.f32 %v273, %v282
    %286 = vrot.lane.b32.xlu0 %v284, 32
    %v287 = vpop.permute.xlu0 %286
    %v289 = vadd.f32 %v279, %v287
    %v290 = vtanh.pop %v289
    %292 = vrot.lane.b32.xlu0 %v290, 64
    %v293 = vpop.permute.xlu0 %292
    %v295 = vmul.f32 %v273, %v293
    %297 = vrot.lane.b32.xlu0 %v295, 32
    %v298 = vpop.permute.xlu0 %297
    %vm300 = vcmask 257026
    %301 = vst.msk [vmem:[#allocation2] sm:$0xc] %vm300, %v298
    %v302 = vpack.c.bf16 %v295, %v295
    %v304 = vrot.slane %v302, 1
    %305 = vrot.lane.b32.xlu0 %v304, 32
    %v306 = vpop.permute.xlu0 %305
    %v308 = vsel %vm141, %v306, 0
    %310 = vmatprep.subr.bf16.mxu0 0
    %311 = vmatpush1.bf16.msra.mxu0 %v137
    %312 = vmatprep.subr.bf16.mxu0 0
    %313 = vmatpush1.bf16.msra.mxu0 %v138
    %314 = vmatprep.subr.bf16.mxu0 0
    %315 = vmatpush1.bf16.msra.mxu0 0
    %316 = vmatprep.subr.bf16.mxu0 0
    %317 = vmatpush1.bf16.msra.mxu0 0
    %318 = vmatprep.subr.bf16.mxu0 0
    %319 = vmatpush1.bf16.msra.mxu0 0
    %320 = vmatprep.subr.bf16.mxu0 0
    %321 = vmatpush1.bf16.msra.mxu0 0
    %322 = vmatprep.subr.bf16.mxu0 0
    %323 = vmatpush1.bf16.msra.mxu0 0
    %324 = vmatprep.subr.bf16.mxu0 0
    %325 = vmatpush1.bf16.msra.mxu0 0
    %326 = vmatprep.subr.bf16.mxu0 0
    %327 = vmatpush1.bf16.msra.mxu0 0
    %328 = vmatprep.subr.bf16.mxu0 0
    %329 = vmatpush1.bf16.msra.mxu0 0
    %330 = vmatprep.subr.bf16.mxu0 0
    %331 = vmatpush1.bf16.msra.mxu0 0
    %332 = vmatprep.subr.bf16.mxu0 0
    %333 = vmatpush1.bf16.msra.mxu0 0
    %334 = vmatprep.subr.bf16.mxu0 0
    %335 = vmatpush1.bf16.msra.mxu0 0
    %336 = vmatprep.subr.bf16.mxu0 0
    %337 = vmatpush1.bf16.msra.mxu0 0
    %338 = vmatprep.subr.bf16.mxu0 0
    %339 = vmatpush1.bf16.msra.mxu0 0
    %340 = vmatprep.subr.bf16.mxu0 0
    %341 = vmatpush1.bf16.msra.mxu0 0
    %342 = vmatprep.mubr.bf16.mxu0 0
    %343 = vmatmul.mubr.bf16.gmra.mrb[0].mxu0 %v308
    %v344 = vpop.f32.mrb[0].mxu0
    %v345 = vadd.f32 0.0, %v344
    %v346 = vpop.f32.mrb[0].mxu0
    %v347 = vpop.f32.mrb[0].mxu0
    %v348 = vpop.f32.mrb[0].mxu0
    %349 = vdwg.mxu0
    %v351 = vrot.slane %v345, 4
    %v353 = vadd.f32 %v123, %v351
    %v354 = vxor.u32 %v353, 2147483648
    %v355 = vmul.f32 %v354, 1.442695
    %v356 = vpow.pop %v355
    %v357 = vadd.f32 %v356, 1.0
    %v358 = vrcp.pop %v357
    %v359 = vmul.f32 1.0, %v358
    %v360 = vmul.f32 %v359, 2.0
    %v361 = vsub.f32 %v360, 1.0
    %v363 = vrot.slane %v289, 6
    %v365 = vmul.f32 %v359, %v363
    %367 = vrot.lane.b32.xlu0 %v361, 64
    %v368 = vpop.permute.xlu0 %367
    %v370 = vmul.f32 %v359, %v368
    %372 = vrot.lane.b32.xlu0 %v370, 32
    %v373 = vpop.permute.xlu0 %372
    %v375 = vadd.f32 %v365, %v373
    %v376 = vtanh.pop %v375
    %378 = vrot.lane.b32.xlu0 %v376, 64
    %v379 = vpop.permute.xlu0 %378
    %v381 = vmul.f32 %v359, %v379
    %383 = vrot.lane.b32.xlu0 %v381, 32
    %v384 = vpop.permute.xlu0 %383
    %vm386 = vcmask 259076
    %387 = vst.msk [vmem:[#allocation2] sm:$0x30] %vm386, %v384
    %v388 = vpack.c.bf16 %v381, %v381
    %v390 = vrot.slane %v388, 2
    %391 = vrot.lane.b32.xlu0 %v390, 32
    %v392 = vpop.permute.xlu0 %391
    %v394 = vsel %vm141, %v392, 0
    %396 = vmatprep.subr.bf16.mxu0 0
    %397 = vmatpush1.bf16.msra.mxu0 %v137
    %398 = vmatprep.subr.bf16.mxu0 0
    %399 = vmatpush1.bf16.msra.mxu0 %v138
    %400 = vmatprep.subr.bf16.mxu0 0
    %401 = vmatpush1.bf16.msra.mxu0 0
    %402 = vmatprep.subr.bf16.mxu0 0
    %403 = vmatpush1.bf16.msra.mxu0 0
    %404 = vmatprep.subr.bf16.mxu0 0
    %405 = vmatpush1.bf16.msra.mxu0 0
    %406 = vmatprep.subr.bf16.mxu0 0
    %407 = vmatpush1.bf16.msra.mxu0 0
    %408 = vmatprep.subr.bf16.mxu0 0
    %409 = vmatpush1.bf16.msra.mxu0 0
    %410 = vmatprep.subr.bf16.mxu0 0
    %411 = vmatpush1.bf16.msra.mxu0 0
    %412 = vmatprep.subr.bf16.mxu0 0
    %413 = vmatpush1.bf16.msra.mxu0 0
    %414 = vmatprep.subr.bf16.mxu0 0
    %415 = vmatpush1.bf16.msra.mxu0 0
    %416 = vmatprep.subr.bf16.mxu0 0
    %417 = vmatpush1.bf16.msra.mxu0 0
    %418 = vmatprep.subr.bf16.mxu0 0
    %419 = vmatpush1.bf16.msra.mxu0 0
    %420 = vmatprep.subr.bf16.mxu0 0
    %421 = vmatpush1.bf16.msra.mxu0 0
    %422 = vmatprep.subr.bf16.mxu0 0
    %423 = vmatpush1.bf16.msra.mxu0 0
    %424 = vmatprep.subr.bf16.mxu0 0
    %425 = vmatpush1.bf16.msra.mxu0 0
    %426 = vmatprep.subr.bf16.mxu0 0
    %427 = vmatpush1.bf16.msra.mxu0 0
    %428 = vmatprep.mubr.bf16.mxu0 0
    %429 = vmatmul.mubr.bf16.gmra.mrb[0].mxu0 %v394
    %v430 = vpop.f32.mrb[0].mxu0
    %v431 = vadd.f32 0.0, %v430
    %v432 = vpop.f32.mrb[0].mxu0
    %v433 = vpop.f32.mrb[0].mxu0
    %v434 = vpop.f32.mrb[0].mxu0
    %435 = vdwg.mxu0
    %v437 = vrot.slane %v431, 2
    %v439 = vadd.f32 %v123, %v437
    %v440 = vxor.u32 %v439, 2147483648
    %v441 = vmul.f32 %v440, 1.442695
    %v442 = vpow.pop %v441
    %v443 = vadd.f32 %v442, 1.0
    %v444 = vrcp.pop %v443
    %v445 = vmul.f32 1.0, %v444
    %v446 = vmul.f32 %v445, 2.0
    %v447 = vsub.f32 %v446, 1.0
    %v449 = vrot.slane %v375, 6
    %v451 = vmul.f32 %v445, %v449
    %453 = vrot.lane.b32.xlu0 %v447, 64
    %v454 = vpop.permute.xlu0 %453
    %v456 = vmul.f32 %v445, %v454
    %458 = vrot.lane.b32.xlu0 %v456, 32
    %v459 = vpop.permute.xlu0 %458
    %v461 = vadd.f32 %v451, %v459
    %v462 = vtanh.pop %v461
    %464 = vrot.lane.b32.xlu0 %v462, 64
    %v465 = vpop.permute.xlu0 %464
    %v467 = vmul.f32 %v445, %v465
    %469 = vrot.lane.b32.xlu0 %v467, 32
    %v470 = vpop.permute.xlu0 %469
    %vm472 = vcmask 261126
    %473 = vst.msk [vmem:[#allocation2] sm:$0xc0] %vm472, %v470
    %v474 = vpack.c.bf16 %v467, %v467
    %v476 = vrot.slane %v474, 3
    %477 = vrot.lane.b32.xlu0 %v476, 32
    %v478 = vpop.permute.xlu0 %477
    %v480 = vsel %vm141, %v478, 0
    %482 = vmatprep.subr.bf16.mxu0 0
    %483 = vmatpush1.bf16.msra.mxu0 %v137
    %484 = vmatprep.subr.bf16.mxu0 0
    %485 = vmatpush1.bf16.msra.mxu0 %v138
    %486 = vmatprep.subr.bf16.mxu0 0
    %487 = vmatpush1.bf16.msra.mxu0 0
    %488 = vmatprep.subr.bf16.mxu0 0
    %489 = vmatpush1.bf16.msra.mxu0 0
    %490 = vmatprep.subr.bf16.mxu0 0
    %491 = vmatpush1.bf16.msra.mxu0 0
    %492 = vmatprep.subr.bf16.mxu0 0
    %493 = vmatpush1.bf16.msra.mxu0 0
    %494 = vmatprep.subr.bf16.mxu0 0
    %495 = vmatpush1.bf16.msra.mxu0 0
    %496 = vmatprep.subr.bf16.mxu0 0
    %497 = vmatpush1.bf16.msra.mxu0 0
    %498 = vmatprep.subr.bf16.mxu0 0
    %499 = vmatpush1.bf16.msra.mxu0 0
    %500 = vmatprep.subr.bf16.mxu0 0
    %501 = vmatpush1.bf16.msra.mxu0 0
    %502 = vmatprep.subr.bf16.mxu0 0
    %503 = vmatpush1.bf16.msra.mxu0 0
    %504 = vmatprep.subr.bf16.mxu0 0
    %505 = vmatpush1.bf16.msra.mxu0 0
    %506 = vmatprep.subr.bf16.mxu0 0
    %507 = vmatpush1.bf16.msra.mxu0 0
    %508 = vmatprep.subr.bf16.mxu0 0
    %509 = vmatpush1.bf16.msra.mxu0 0
    %510 = vmatprep.subr.bf16.mxu0 0
    %511 = vmatpush1.bf16.msra.mxu0 0
    %512 = vmatprep.subr.bf16.mxu0 0
    %513 = vmatpush1.bf16.msra.mxu0 0
    %514 = vmatprep.mubr.bf16.mxu0 0
    %515 = vmatmul.mubr.bf16.gmra.mrb[0].mxu0 %v480
    %v516 = vpop.f32.mrb[0].mxu0
    %v517 = vadd.f32 0.0, %v516
    %v518 = vpop.f32.mrb[0].mxu0
    %v519 = vpop.f32.mrb[0].mxu0
    %v520 = vpop.f32.mrb[0].mxu0
    %521 = vdwg.mxu0
    %v522 = vadd.f32 %v126, %v517
    %v523 = vxor.u32 %v522, 2147483648
    %v524 = vmul.f32 %v523, 1.442695
    %v525 = vpow.pop %v524
    %v526 = vadd.f32 %v525, 1.0
    %v527 = vrcp.pop %v526
    %v528 = vmul.f32 1.0, %v527
    %v529 = vmul.f32 %v528, 2.0
    %v530 = vsub.f32 %v529, 1.0
    %v532 = vrot.slane %v461, 6
    %v534 = vmul.f32 %v528, %v532
    %536 = vrot.lane.b32.xlu0 %v530, 64
    %v537 = vpop.permute.xlu0 %536
    %v539 = vmul.f32 %v528, %v537
    %541 = vrot.lane.b32.xlu0 %v539, 32
    %v542 = vpop.permute.xlu0 %541
    %v544 = vadd.f32 %v534, %v542
    %v545 = vtanh.pop %v544
    %547 = vrot.lane.b32.xlu0 %v545, 64
    %v548 = vpop.permute.xlu0 %547
    %v550 = vmul.f32 %v528, %v548
    %552 = vrot.lane.b32.xlu0 %v550, 32
    %v553 = vpop.permute.xlu0 %552
    %555 = vst.msk [vmem:[#allocation2 + $0x8] sm:$0x3] %vm215, %v553
    %v556 = vpack.c.bf16 %v550, %v550
    %558 = vrot.lane.b32.xlu0 %v556, 32
    %v559 = vpop.permute.xlu0 %558
    %v561 = vsel %vm141, %v559, 0
    %563 = vmatprep.subr.bf16.mxu0 0
    %564 = vmatpush1.bf16.msra.mxu0 %v137
    %565 = vmatprep.subr.bf16.mxu0 0
    %566 = vmatpush1.bf16.msra.mxu0 %v138
    %567 = vmatprep.subr.bf16.mxu0 0
    %568 = vmatpush1.bf16.msra.mxu0 0
    %569 = vmatprep.subr.bf16.mxu0 0
    %570 = vmatpush1.bf16.msra.mxu0 0
    %571 = vmatprep.subr.bf16.mxu0 0
    %572 = vmatpush1.bf16.msra.mxu0 0
    %573 = vmatprep.subr.bf16.mxu0 0
    %574 = vmatpush1.bf16.msra.mxu0 0
    %575 = vmatprep.subr.bf16.mxu0 0
    %576 = vmatpush1.bf16.msra.mxu0 0
    %577 = vmatprep.subr.bf16.mxu0 0
    %578 = vmatpush1.bf16.msra.mxu0 0
    %579 = vmatprep.subr.bf16.mxu0 0
    %580 = vmatpush1.bf16.msra.mxu0 0
    %581 = vmatprep.subr.bf16.mxu0 0
    %582 = vmatpush1.bf16.msra.mxu0 0
    %583 = vmatprep.subr.bf16.mxu0 0
    %584 = vmatpush1.bf16.msra.mxu0 0
    %585 = vmatprep.subr.bf16.mxu0 0
    %586 = vmatpush1.bf16.msra.mxu0 0
    %587 = vmatprep.subr.bf16.mxu0 0
    %588 = vmatpush1.bf16.msra.mxu0 0
    %589 = vmatprep.subr.bf16.mxu0 0
    %590 = vmatpush1.bf16.msra.mxu0 0
    %591 = vmatprep.subr.bf16.mxu0 0
    %592 = vmatpush1.bf16.msra.mxu0 0
    %593 = vmatprep.subr.bf16.mxu0 0
    %594 = vmatpush1.bf16.msra.mxu0 0
    %595 = vmatprep.mubr.bf16.mxu0 0
    %596 = vmatmul.mubr.bf16.gmra.mrb[0].mxu0 %v561
    %v597 = vpop.f32.mrb[0].mxu0
    %v598 = vadd.f32 0.0, %v597
    %v599 = vpop.f32.mrb[0].mxu0
    %v600 = vpop.f32.mrb[0].mxu0
    %v601 = vpop.f32.mrb[0].mxu0
    %602 = vdwg.mxu0
    %v604 = vrot.slane %v598, 6
    %v606 = vadd.f32 %v126, %v604
    %v607 = vxor.u32 %v606, 2147483648
    %v608 = vmul.f32 %v607, 1.442695
    %v609 = vpow.pop %v608
    %v610 = vadd.f32 %v609, 1.0
    %v611 = vrcp.pop %v610
    %v612 = vmul.f32 1.0, %v611
    %v613 = vmul.f32 %v612, 2.0
    %v614 = vsub.f32 %v613, 1.0
    %v616 = vrot.slane %v544, 6
    %v618 = vmul.f32 %v612, %v616
    %620 = vrot.lane.b32.xlu0 %v614, 64
    %v621 = vpop.permute.xlu0 %620
    %v623 = vmul.f32 %v612, %v621
    %625 = vrot.lane.b32.xlu0 %v623, 32
    %v626 = vpop.permute.xlu0 %625
    %v628 = vadd.f32 %v618, %v626
    %v629 = vtanh.pop %v628
    %631 = vrot.lane.b32.xlu0 %v629, 64
    %v632 = vpop.permute.xlu0 %631
    %v634 = vmul.f32 %v612, %v632
    %636 = vrot.lane.b32.xlu0 %v634, 32
    %v637 = vpop.permute.xlu0 %636
    %639 = vst.msk [vmem:[#allocation2 + $0x8] sm:$0xc] %vm300, %v637
    %v640 = vpack.c.bf16 %v634, %v634
    %v642 = vrot.slane %v640, 1
    %643 = vrot.lane.b32.xlu0 %v642, 32
    %v644 = vpop.permute.xlu0 %643
    %v646 = vsel %vm141, %v644, 0
    %648 = vmatprep.subr.bf16.mxu0 0
    %649 = vmatpush1.bf16.msra.mxu0 %v137
    %650 = vmatprep.subr.bf16.mxu0 0
    %651 = vmatpush1.bf16.msra.mxu0 %v138
    %652 = vmatprep.subr.bf16.mxu0 0
    %653 = vmatpush1.bf16.msra.mxu0 0
    %654 = vmatprep.subr.bf16.mxu0 0
    %655 = vmatpush1.bf16.msra.mxu0 0
    %656 = vmatprep.subr.bf16.mxu0 0
    %657 = vmatpush1.bf16.msra.mxu0 0
    %658 = vmatprep.subr.bf16.mxu0 0
    %659 = vmatpush1.bf16.msra.mxu0 0
    %660 = vmatprep.subr.bf16.mxu0 0
    %661 = vmatpush1.bf16.msra.mxu0 0
    %662 = vmatprep.subr.bf16.mxu0 0
    %663 = vmatpush1.bf16.msra.mxu0 0
    %664 = vmatprep.subr.bf16.mxu0 0
    %665 = vmatpush1.bf16.msra.mxu0 0
    %666 = vmatprep.subr.bf16.mxu0 0
    %667 = vmatpush1.bf16.msra.mxu0 0
    %668 = vmatprep.subr.bf16.mxu0 0
    %669 = vmatpush1.bf16.msra.mxu0 0
    %670 = vmatprep.subr.bf16.mxu0 0
    %671 = vmatpush1.bf16.msra.mxu0 0
    %672 = vmatprep.subr.bf16.mxu0 0
    %673 = vmatpush1.bf16.msra.mxu0 0
    %674 = vmatprep.subr.bf16.mxu0 0
    %675 = vmatpush1.bf16.msra.mxu0 0
    %676 = vmatprep.subr.bf16.mxu0 0
    %677 = vmatpush1.bf16.msra.mxu0 0
    %678 = vmatprep.subr.bf16.mxu0 0
    %679 = vmatpush1.bf16.msra.mxu0 0
    %680 = vmatprep.mubr.bf16.mxu0 0
    %681 = vmatmul.mubr.bf16.gmra.mrb[0].mxu0 %v646
    %v682 = vpop.f32.mrb[0].mxu0
    %v683 = vadd.f32 0.0, %v682
    %v684 = vpop.f32.mrb[0].mxu0
    %v685 = vpop.f32.mrb[0].mxu0
    %v686 = vpop.f32.mrb[0].mxu0
    %687 = vdwg.mxu0
    %v689 = vrot.slane %v683, 4
    %v691 = vadd.f32 %v126, %v689
    %v692 = vxor.u32 %v691, 2147483648
    %v693 = vmul.f32 %v692, 1.442695
    %v694 = vpow.pop %v693
    %v695 = vadd.f32 %v694, 1.0
    %v696 = vrcp.pop %v695
    %v697 = vmul.f32 1.0, %v696
    %v698 = vmul.f32 %v697, 2.0
    %v699 = vsub.f32 %v698, 1.0
    %v701 = vrot.slane %v628, 6
    %v703 = vmul.f32 %v697, %v701
    %705 = vrot.lane.b32.xlu0 %v699, 64
    %v706 = vpop.permute.xlu0 %705
    %v708 = vmul.f32 %v697, %v706
    %710 = vrot.lane.b32.xlu0 %v708, 32
    %v711 = vpop.permute.xlu0 %710
    %v713 = vadd.f32 %v703, %v711
    %v714 = vtanh.pop %v713
    %716 = vrot.lane.b32.xlu0 %v714, 64
    %v717 = vpop.permute.xlu0 %716
    %v719 = vmul.f32 %v697, %v717
    %721 = vrot.lane.b32.xlu0 %v719, 32
    %v722 = vpop.permute.xlu0 %721
    %724 = vst.msk [vmem:[#allocation2 + $0x8] sm:$0x30] %vm386, %v722
    %v725 = vpack.c.bf16 %v719, %v719
    %v727 = vrot.slane %v725, 2
    %728 = vrot.lane.b32.xlu0 %v727, 32
    %v729 = vpop.permute.xlu0 %728
    %v731 = vsel %vm141, %v729, 0
    %733 = vmatprep.subr.bf16.mxu0 0
    %734 = vmatpush1.bf16.msra.mxu0 %v137
    %735 = vmatprep.subr.bf16.mxu0 0
    %736 = vmatpush1.bf16.msra.mxu0 %v138
    %737 = vmatprep.subr.bf16.mxu0 0
    %738 = vmatpush1.bf16.msra.mxu0 0
    %739 = vmatprep.subr.bf16.mxu0 0
    %740 = vmatpush1.bf16.msra.mxu0 0
    %741 = vmatprep.subr.bf16.mxu0 0
    %742 = vmatpush1.bf16.msra.mxu0 0
    %743 = vmatprep.subr.bf16.mxu0 0
    %744 = vmatpush1.bf16.msra.mxu0 0
    %745 = vmatprep.subr.bf16.mxu0 0
    %746 = vmatpush1.bf16.msra.mxu0 0
    %747 = vmatprep.subr.bf16.mxu0 0
    %748 = vmatpush1.bf16.msra.mxu0 0
    %749 = vmatprep.subr.bf16.mxu0 0
    %750 = vmatpush1.bf16.msra.mxu0 0
    %751 = vmatprep.subr.bf16.mxu0 0
    %752 = vmatpush1.bf16.msra.mxu0 0
    %753 = vmatprep.subr.bf16.mxu0 0
    %754 = vmatpush1.bf16.msra.mxu0 0
    %755 = vmatprep.subr.bf16.mxu0 0
    %756 = vmatpush1.bf16.msra.mxu0 0
    %757 = vmatprep.subr.bf16.mxu0 0
    %758 = vmatpush1.bf16.msra.mxu0 0
    %759 = vmatprep.subr.bf16.mxu0 0
    %760 = vmatpush1.bf16.msra.mxu0 0
    %761 = vmatprep.subr.bf16.mxu0 0
    %762 = vmatpush1.bf16.msra.mxu0 0
    %763 = vmatprep.subr.bf16.mxu0 0
    %764 = vmatpush1.bf16.msra.mxu0 0
    %765 = vmatprep.mubr.bf16.mxu0 0
    %766 = vmatmul.mubr.bf16.gmra.mrb[0].mxu0 %v731
    %v767 = vpop.f32.mrb[0].mxu0
    %v768 = vadd.f32 0.0, %v767
    %v769 = vpop.f32.mrb[0].mxu0
    %v770 = vpop.f32.mrb[0].mxu0
    %v771 = vpop.f32.mrb[0].mxu0
    %772 = vdwg.mxu0
    %v774 = vrot.slane %v768, 2
    %v776 = vadd.f32 %v126, %v774
    %v777 = vxor.u32 %v776, 2147483648
    %v778 = vmul.f32 %v777, 1.442695
    %v779 = vpow.pop %v778
    %v780 = vadd.f32 %v779, 1.0
    %v781 = vrcp.pop %v780
    %v782 = vmul.f32 1.0, %v781
    %v783 = vmul.f32 %v782, 2.0
    %v784 = vsub.f32 %v783, 1.0
    %v786 = vrot.slane %v713, 6
    %v788 = vmul.f32 %v782, %v786
    %790 = vrot.lane.b32.xlu0 %v784, 64
    %v791 = vpop.permute.xlu0 %790
    %v793 = vmul.f32 %v782, %v791
    %795 = vrot.lane.b32.xlu0 %v793, 32
    %v796 = vpop.permute.xlu0 %795
    %v798 = vadd.f32 %v788, %v796
    %v799 = vtanh.pop %v798
    %801 = vrot.lane.b32.xlu0 %v799, 64
    %v802 = vpop.permute.xlu0 %801
    %v804 = vmul.f32 %v782, %v802
    %806 = vrot.lane.b32.xlu0 %v804, 32
    %v807 = vpop.permute.xlu0 %806
    %809 = vst.msk [vmem:[#allocation2 + $0x8] sm:$0xc0] %vm472, %v807
    %v810 = vld [vmem:[#allocation2] sm:$0xff]
    %v811 = vld [vmem:[#allocation2 + $0x8] sm:$0xff]
    %v812 = vpack.c.bf16 %v811, %v810
    %v813 = vld [vmem:[%s4] sm:$0xf]
    %v814 = vld [vmem:[%s4 + $0x4] sm:$0xf]
    %v815 = vld [vmem:[%s4 + $0x8] sm:$0xf]
    %v816 = vld [vmem:[%s4 + $0xc] sm:$0xf]
    %v817 = vld [vmem:[#allocation4] sm:$0xf]
    %v818 = vld [vmem:[#allocation4 + $0x4] sm:$0xf]
    %v819 = vld [vmem:[#allocation4 + $0x8] sm:$0xf]
    %v820 = vld [vmem:[#allocation4 + $0xc] sm:$0xf]
    %v821 = vld [vmem:[#allocation6] sm:$0x1]
    %v823 = vlaneseq
    %v824 = vshrl.u32 %v823, 7
    %v825 = vsub.s32 0, %v824
    %v826 = vrot.slane %v821, %v825
    %v832 = vunpack.c.l.b16 %v813
    %v833 = vunpack.c.l.b16 %v814
    %v834 = vunpack.c.l.b16 %v815
    %v835 = vunpack.c.l.b16 %v816
    %v836 = vpack.c.b16 %v833, %v832
    %v837 = vpack.c.b16 %v835, %v834
    %v841 = vsel %vm141, %v812, 0
    %843 = vmatprep.subr.bf16.mxu0 0
    %844 = vmatpush1.bf16.msra.mxu0 %v836
    %845 = vmatprep.subr.bf16.mxu0 0
    %846 = vmatpush1.bf16.msra.mxu0 %v837
    %847 = vmatprep.subr.bf16.mxu0 0
    %848 = vmatpush1.bf16.msra.mxu0 0
    %849 = vmatprep.subr.bf16.mxu0 0
    %850 = vmatpush1.bf16.msra.mxu0 0
    %851 = vmatprep.subr.bf16.mxu0 0
    %852 = vmatpush1.bf16.msra.mxu0 0
    %853 = vmatprep.subr.bf16.mxu0 0
    %854 = vmatpush1.bf16.msra.mxu0 0
    %855 = vmatprep.subr.bf16.mxu0 0
    %856 = vmatpush1.bf16.msra.mxu0 0
    %857 = vmatprep.subr.bf16.mxu0 0
    %858 = vmatpush1.bf16.msra.mxu0 0
    %859 = vmatprep.subr.bf16.mxu0 0
    %860 = vmatpush1.bf16.msra.mxu0 0
    %861 = vmatprep.subr.bf16.mxu0 0
    %862 = vmatpush1.bf16.msra.mxu0 0
    %863 = vmatprep.subr.bf16.mxu0 0
    %864 = vmatpush1.bf16.msra.mxu0 0
    %865 = vmatprep.subr.bf16.mxu0 0
    %866 = vmatpush1.bf16.msra.mxu0 0
    %867 = vmatprep.subr.bf16.mxu0 0
    %868 = vmatpush1.bf16.msra.mxu0 0
    %869 = vmatprep.subr.bf16.mxu0 0
    %870 = vmatpush1.bf16.msra.mxu0 0
    %871 = vmatprep.subr.bf16.mxu0 0
    %872 = vmatpush1.bf16.msra.mxu0 0
    %873 = vmatprep.subr.bf16.mxu0 0
    %874 = vmatpush1.bf16.msra.mxu0 0
    %875 = vmatprep.mubr.bf16.mxu0 0
    %876 = vmatmul.mubr.bf16.gmra.mrb[0].mxu0 %v841
    %v877 = vpop.f32.mrb[0].mxu0
    %v878 = vadd.f32 %v826, %v877
    %v879 = vpop.f32.mrb[0].mxu0
    %v880 = vpop.f32.mrb[0].mxu0
    %v881 = vadd.f32 %v826, %v880
    %v882 = vpop.f32.mrb[0].mxu0
    %883 = vdwg.mxu0
    %v888 = vunpack.c.l.b16 %v817
    %v889 = vunpack.c.l.b16 %v818
    %v890 = vunpack.c.l.b16 %v819
    %v891 = vunpack.c.l.b16 %v820
    %v892 = vpack.c.b16 %v889, %v888
    %v893 = vpack.c.b16 %v891, %v890
    %896 = vmatprep.subr.bf16.mxu0 0
    %897 = vmatpush1.bf16.msra.mxu0 %v892
    %898 = vmatprep.subr.bf16.mxu0 0
    %899 = vmatpush1.bf16.msra.mxu0 %v893
    %900 = vmatprep.subr.bf16.mxu0 0
    %901 = vmatpush1.bf16.msra.mxu0 0
    %902 = vmatprep.subr.bf16.mxu0 0
    %903 = vmatpush1.bf16.msra.mxu0 0
    %904 = vmatprep.subr.bf16.mxu0 0
    %905 = vmatpush1.bf16.msra.mxu0 0
    %906 = vmatprep.subr.bf16.mxu0 0
    %907 = vmatpush1.bf16.msra.mxu0 0
    %908 = vmatprep.subr.bf16.mxu0 0
    %909 = vmatpush1.bf16.msra.mxu0 0
    %910 = vmatprep.subr.bf16.mxu0 0
    %911 = vmatpush1.bf16.msra.mxu0 0
    %912 = vmatprep.subr.bf16.mxu0 0
    %913 = vmatpush1.bf16.msra.mxu0 0
    %914 = vmatprep.subr.bf16.mxu0 0
    %915 = vmatpush1.bf16.msra.mxu0 0
    %916 = vmatprep.subr.bf16.mxu0 0
    %917 = vmatpush1.bf16.msra.mxu0 0
    %918 = vmatprep.subr.bf16.mxu0 0
    %919 = vmatpush1.bf16.msra.mxu0 0
    %920 = vmatprep.subr.bf16.mxu0 0
    %921 = vmatpush1.bf16.msra.mxu0 0
    %922 = vmatprep.subr.bf16.mxu0 0
    %923 = vmatpush1.bf16.msra.mxu0 0
    %924 = vmatprep.subr.bf16.mxu0 0
    %925 = vmatpush1.bf16.msra.mxu0 0
    %926 = vmatprep.subr.bf16.mxu0 0
    %927 = vmatpush1.bf16.msra.mxu0 0
    %928 = vmatprep.mubr.bf16.mxu0 0
    %929 = vmatmul.mubr.bf16.gmra.mrb[0].mxu0 %v143
    %v930 = vpop.f32.mrb[0].mxu0
    %v931 = vadd.f32 0.0, %v930
    %v932 = vpop.f32.mrb[0].mxu0
    %v933 = vpop.f32.mrb[0].mxu0
    %v934 = vpop.f32.mrb[0].mxu0
    %935 = vdwg.mxu0
    %v936 = vadd.f32 %v878, %v931
    %v937 = vxor.u32 %v936, 2147483648
    %v938 = vmul.f32 %v937, 1.442695
    %v939 = vpow.pop %v938
    %v940 = vadd.f32 %v939, 1.0
    %v941 = vrcp.pop %v940
    %v942 = vmul.f32 1.0, %v941
    %v943 = vmul.f32 %v942, 2.0
    %v944 = vsub.f32 %v943, 1.0
    %v945 = vmul.f32 %v942, 0.0
    %947 = vrot.lane.b32.xlu0 %v944, 64
    %v948 = vpop.permute.xlu0 %947
    %v950 = vmul.f32 %v942, %v948
    %952 = vrot.lane.b32.xlu0 %v950, 32
    %v953 = vpop.permute.xlu0 %952
    %v955 = vadd.f32 %v945, %v953
    %v956 = vtanh.pop %v955
    %958 = vrot.lane.b32.xlu0 %v956, 64
    %v959 = vpop.permute.xlu0 %958
    %v961 = vmul.f32 %v942, %v959
    %v962 = vpack.c.bf16 %v961, %v961
    %964 = vrot.lane.b32.xlu0 %v962, 32
    %v965 = vpop.permute.xlu0 %964
    %v967 = vsel %vm141, %v965, 0
    %969 = vmatprep.subr.bf16.mxu0 0
    %970 = vmatpush1.bf16.msra.mxu0 %v892
    %971 = vmatprep.subr.bf16.mxu0 0
    %972 = vmatpush1.bf16.msra.mxu0 %v893
    %973 = vmatprep.subr.bf16.mxu0 0
    %974 = vmatpush1.bf16.msra.mxu0 0
    %975 = vmatprep.subr.bf16.mxu0 0
    %976 = vmatpush1.bf16.msra.mxu0 0
    %977 = vmatprep.subr.bf16.mxu0 0
    %978 = vmatpush1.bf16.msra.mxu0 0
    %979 = vmatprep.subr.bf16.mxu0 0
    %980 = vmatpush1.bf16.msra.mxu0 0
    %981 = vmatprep.subr.bf16.mxu0 0
    %982 = vmatpush1.bf16.msra.mxu0 0
    %983 = vmatprep.subr.bf16.mxu0 0
    %984 = vmatpush1.bf16.msra.mxu0 0
    %985 = vmatprep.subr.bf16.mxu0 0
    %986 = vmatpush1.bf16.msra.mxu0 0
    %987 = vmatprep.subr.bf16.mxu0 0
    %988 = vmatpush1.bf16.msra.mxu0 0
    %989 = vmatprep.subr.bf16.mxu0 0
    %990 = vmatpush1.bf16.msra.mxu0 0
    %991 = vmatprep.subr.bf16.mxu0 0
    %992 = vmatpush1.bf16.msra.mxu0 0
    %993 = vmatprep.subr.bf16.mxu0 0
    %994 = vmatpush1.bf16.msra.mxu0 0
    %995 = vmatprep.subr.bf16.mxu0 0
    %996 = vmatpush1.bf16.msra.mxu0 0
    %997 = vmatprep.subr.bf16.mxu0 0
    %998 = vmatpush1.bf16.msra.mxu0 0
    %999 = vmatprep.subr.bf16.mxu0 0
    %1000 = vmatpush1.bf16.msra.mxu0 0
    %1001 = vmatprep.mubr.bf16.mxu0 0
    %1002 = vmatmul.mubr.bf16.gmra.mrb[0].mxu0 %v967
    %v1003 = vpop.f32.mrb[0].mxu0
    %v1004 = vadd.f32 0.0, %v1003
    %v1005 = vpop.f32.mrb[0].mxu0
    %v1006 = vpop.f32.mrb[0].mxu0
    %v1007 = vpop.f32.mrb[0].mxu0
    %1008 = vdwg.mxu0
    %v1010 = vrot.slane %v1004, 6
    %v1012 = vadd.f32 %v878, %v1010
    %v1013 = vxor.u32 %v1012, 2147483648
    %v1014 = vmul.f32 %v1013, 1.442695
    %v1015 = vpow.pop %v1014
    %v1016 = vadd.f32 %v1015, 1.0
    %v1017 = vrcp.pop %v1016
    %v1018 = vmul.f32 1.0, %v1017
    %v1019 = vmul.f32 %v1018, 2.0
    %v1020 = vsub.f32 %v1019, 1.0
    %v1022 = vrot.slane %v955, 6
    %v1024 = vmul.f32 %v1018, %v1022
    %1026 = vrot.lane.b32.xlu0 %v1020, 64
    %v1027 = vpop.permute.xlu0 %1026
    %v1029 = vmul.f32 %v1018, %v1027
    %1031 = vrot.lane.b32.xlu0 %v1029, 32
    %v1032 = vpop.permute.xlu0 %1031
    %v1034 = vadd.f32 %v1024, %v1032
    %v1035 = vtanh.pop %v1034
    %1037 = vrot.lane.b32.xlu0 %v1035, 64
    %v1038 = vpop.permute.xlu0 %1037
    %v1040 = vmul.f32 %v1018, %v1038
    %v1041 = vpack.c.bf16 %v1040, %v1040
    %v1043 = vrot.slane %v1041, 1
    %1044 = vrot.lane.b32.xlu0 %v1043, 32
    %v1045 = vpop.permute.xlu0 %1044
    %v1047 = vsel %vm141, %v1045, 0
    %1049 = vmatprep.subr.bf16.mxu0 0
    %1050 = vmatpush1.bf16.msra.mxu0 %v892
    %1051 = vmatprep.subr.bf16.mxu0 0
    %1052 = vmatpush1.bf16.msra.mxu0 %v893
    %1053 = vmatprep.subr.bf16.mxu0 0
    %1054 = vmatpush1.bf16.msra.mxu0 0
    %1055 = vmatprep.subr.bf16.mxu0 0
    %1056 = vmatpush1.bf16.msra.mxu0 0
    %1057 = vmatprep.subr.bf16.mxu0 0
    %1058 = vmatpush1.bf16.msra.mxu0 0
    %1059 = vmatprep.subr.bf16.mxu0 0
    %1060 = vmatpush1.bf16.msra.mxu0 0
    %1061 = vmatprep.subr.bf16.mxu0 0
    %1062 = vmatpush1.bf16.msra.mxu0 0
    %1063 = vmatprep.subr.bf16.mxu0 0
    %1064 = vmatpush1.bf16.msra.mxu0 0
    %1065 = vmatprep.subr.bf16.mxu0 0
    %1066 = vmatpush1.bf16.msra.mxu0 0
    %1067 = vmatprep.subr.bf16.mxu0 0
    %1068 = vmatpush1.bf16.msra.mxu0 0
    %1069 = vmatprep.subr.bf16.mxu0 0
    %1070 = vmatpush1.bf16.msra.mxu0 0
    %1071 = vmatprep.subr.bf16.mxu0 0
    %1072 = vmatpush1.bf16.msra.mxu0 0
    %1073 = vmatprep.subr.bf16.mxu0 0
    %1074 = vmatpush1.bf16.msra.mxu0 0
    %1075 = vmatprep.subr.bf16.mxu0 0
    %1076 = vmatpush1.bf16.msra.mxu0 0
    %1077 = vmatprep.subr.bf16.mxu0 0
    %1078 = vmatpush1.bf16.msra.mxu0 0
    %1079 = vmatprep.subr.bf16.mxu0 0
    %1080 = vmatpush1.bf16.msra.mxu0 0
    %1081 = vmatprep.mubr.bf16.mxu0 0
    %1082 = vmatmul.mubr.bf16.gmra.mrb[0].mxu0 %v1047
    %v1083 = vpop.f32.mrb[0].mxu0
    %v1084 = vadd.f32 0.0, %v1083
    %v1085 = vpop.f32.mrb[0].mxu0
    %v1086 = vpop.f32.mrb[0].mxu0
    %v1087 = vpop.f32.mrb[0].mxu0
    %1088 = vdwg.mxu0
    %v1090 = vrot.slane %v1084, 4
    %v1092 = vadd.f32 %v878, %v1090
    %v1093 = vxor.u32 %v1092, 2147483648
    %v1094 = vmul.f32 %v1093, 1.442695
    %v1095 = vpow.pop %v1094
    %v1096 = vadd.f32 %v1095, 1.0
    %v1097 = vrcp.pop %v1096
    %v1098 = vmul.f32 1.0, %v1097
    %v1099 = vmul.f32 %v1098, 2.0
    %v1100 = vsub.f32 %v1099, 1.0
    %v1102 = vrot.slane %v1034, 6
    %v1104 = vmul.f32 %v1098, %v1102
    %1106 = vrot.lane.b32.xlu0 %v1100, 64
    %v1107 = vpop.permute.xlu0 %1106
    %v1109 = vmul.f32 %v1098, %v1107
    %1111 = vrot.lane.b32.xlu0 %v1109, 32
    %v1112 = vpop.permute.xlu0 %1111
    %v1114 = vadd.f32 %v1104, %v1112
    %v1115 = vtanh.pop %v1114
    %1117 = vrot.lane.b32.xlu0 %v1115, 64
    %v1118 = vpop.permute.xlu0 %1117
    %v1120 = vmul.f32 %v1098, %v1118
    %v1121 = vpack.c.bf16 %v1120, %v1120
    %v1123 = vrot.slane %v1121, 2
    %1124 = vrot.lane.b32.xlu0 %v1123, 32
    %v1125 = vpop.permute.xlu0 %1124
    %v1127 = vsel %vm141, %v1125, 0
    %1129 = vmatprep.subr.bf16.mxu0 0
    %1130 = vmatpush1.bf16.msra.mxu0 %v892
    %1131 = vmatprep.subr.bf16.mxu0 0
    %1132 = vmatpush1.bf16.msra.mxu0 %v893
    %1133 = vmatprep.subr.bf16.mxu0 0
    %1134 = vmatpush1.bf16.msra.mxu0 0
    %1135 = vmatprep.subr.bf16.mxu0 0
    %1136 = vmatpush1.bf16.msra.mxu0 0
    %1137 = vmatprep.subr.bf16.mxu0 0
    %1138 = vmatpush1.bf16.msra.mxu0 0
    %1139 = vmatprep.subr.bf16.mxu0 0
    %1140 = vmatpush1.bf16.msra.mxu0 0
    %1141 = vmatprep.subr.bf16.mxu0 0
    %1142 = vmatpush1.bf16.msra.mxu0 0
    %1143 = vmatprep.subr.bf16.mxu0 0
    %1144 = vmatpush1.bf16.msra.mxu0 0
    %1145 = vmatprep.subr.bf16.mxu0 0
    %1146 = vmatpush1.bf16.msra.mxu0 0
    %1147 = vmatprep.subr.bf16.mxu0 0
    %1148 = vmatpush1.bf16.msra.mxu0 0
    %1149 = vmatprep.subr.bf16.mxu0 0
    %1150 = vmatpush1.bf16.msra.mxu0 0
    %1151 = vmatprep.subr.bf16.mxu0 0
    %1152 = vmatpush1.bf16.msra.mxu0 0
    %1153 = vmatprep.subr.bf16.mxu0 0
    %1154 = vmatpush1.bf16.msra.mxu0 0
    %1155 = vmatprep.subr.bf16.mxu0 0
    %1156 = vmatpush1.bf16.msra.mxu0 0
    %1157 = vmatprep.subr.bf16.mxu0 0
    %1158 = vmatpush1.bf16.msra.mxu0 0
    %1159 = vmatprep.subr.bf16.mxu0 0
    %1160 = vmatpush1.bf16.msra.mxu0 0
    %1161 = vmatprep.mubr.bf16.mxu0 0
    %1162 = vmatmul.mubr.bf16.gmra.mrb[0].mxu0 %v1127
    %v1163 = vpop.f32.mrb[0].mxu0
    %v1164 = vadd.f32 0.0, %v1163
    %v1165 = vpop.f32.mrb[0].mxu0
    %v1166 = vpop.f32.mrb[0].mxu0
    %v1167 = vpop.f32.mrb[0].mxu0
    %1168 = vdwg.mxu0
    %v1170 = vrot.slane %v1164, 2
    %v1172 = vadd.f32 %v878, %v1170
    %v1173 = vxor.u32 %v1172, 2147483648
    %v1174 = vmul.f32 %v1173, 1.442695
    %v1175 = vpow.pop %v1174
    %v1176 = vadd.f32 %v1175, 1.0
    %v1177 = vrcp.pop %v1176
    %v1178 = vmul.f32 1.0, %v1177
    %v1179 = vmul.f32 %v1178, 2.0
    %v1180 = vsub.f32 %v1179, 1.0
    %v1182 = vrot.slane %v1114, 6
    %v1184 = vmul.f32 %v1178, %v1182
    %1186 = vrot.lane.b32.xlu0 %v1180, 64
    %v1187 = vpop.permute.xlu0 %1186
    %v1189 = vmul.f32 %v1178, %v1187
    %1191 = vrot.lane.b32.xlu0 %v1189, 32
    %v1192 = vpop.permute.xlu0 %1191
    %v1194 = vadd.f32 %v1184, %v1192
    %v1195 = vtanh.pop %v1194
    %1197 = vrot.lane.b32.xlu0 %v1195, 64
    %v1198 = vpop.permute.xlu0 %1197
    %v1200 = vmul.f32 %v1178, %v1198
    %v1201 = vpack.c.bf16 %v1200, %v1200
    %v1203 = vrot.slane %v1201, 3
    %1204 = vrot.lane.b32.xlu0 %v1203, 32
    %v1205 = vpop.permute.xlu0 %1204
    %v1207 = vsel %vm141, %v1205, 0
    %1209 = vmatprep.subr.bf16.mxu0 0
    %1210 = vmatpush1.bf16.msra.mxu0 %v892
    %1211 = vmatprep.subr.bf16.mxu0 0
    %1212 = vmatpush1.bf16.msra.mxu0 %v893
    %1213 = vmatprep.subr.bf16.mxu0 0
    %1214 = vmatpush1.bf16.msra.mxu0 0
    %1215 = vmatprep.subr.bf16.mxu0 0
    %1216 = vmatpush1.bf16.msra.mxu0 0
    %1217 = vmatprep.subr.bf16.mxu0 0
    %1218 = vmatpush1.bf16.msra.mxu0 0
    %1219 = vmatprep.subr.bf16.mxu0 0
    %1220 = vmatpush1.bf16.msra.mxu0 0
    %1221 = vmatprep.subr.bf16.mxu0 0
    %1222 = vmatpush1.bf16.msra.mxu0 0
    %1223 = vmatprep.subr.bf16.mxu0 0
    %1224 = vmatpush1.bf16.msra.mxu0 0
    %1225 = vmatprep.subr.bf16.mxu0 0
    %1226 = vmatpush1.bf16.msra.mxu0 0
    %1227 = vmatprep.subr.bf16.mxu0 0
    %1228 = vmatpush1.bf16.msra.mxu0 0
    %1229 = vmatprep.subr.bf16.mxu0 0
    %1230 = vmatpush1.bf16.msra.mxu0 0
    %1231 = vmatprep.subr.bf16.mxu0 0
    %1232 = vmatpush1.bf16.msra.mxu0 0
    %1233 = vmatprep.subr.bf16.mxu0 0
    %1234 = vmatpush1.bf16.msra.mxu0 0
    %1235 = vmatprep.subr.bf16.mxu0 0
    %1236 = vmatpush1.bf16.msra.mxu0 0
    %1237 = vmatprep.subr.bf16.mxu0 0
    %1238 = vmatpush1.bf16.msra.mxu0 0
    %1239 = vmatprep.subr.bf16.mxu0 0
    %1240 = vmatpush1.bf16.msra.mxu0 0
    %1241 = vmatprep.mubr.bf16.mxu0 0
    %1242 = vmatmul.mubr.bf16.gmra.mrb[0].mxu0 %v1207
    %v1243 = vpop.f32.mrb[0].mxu0
    %v1244 = vadd.f32 0.0, %v1243
    %v1245 = vpop.f32.mrb[0].mxu0
    %v1246 = vpop.f32.mrb[0].mxu0
    %v1247 = vpop.f32.mrb[0].mxu0
    %1248 = vdwg.mxu0
    %v1249 = vadd.f32 %v881, %v1244
    %v1250 = vxor.u32 %v1249, 2147483648
    %v1251 = vmul.f32 %v1250, 1.442695
    %v1252 = vpow.pop %v1251
    %v1253 = vadd.f32 %v1252, 1.0
    %v1254 = vrcp.pop %v1253
    %v1255 = vmul.f32 1.0, %v1254
    %v1256 = vmul.f32 %v1255, 2.0
    %v1257 = vsub.f32 %v1256, 1.0
    %v1259 = vrot.slane %v1194, 6
    %v1261 = vmul.f32 %v1255, %v1259
    %1263 = vrot.lane.b32.xlu0 %v1257, 64
    %v1264 = vpop.permute.xlu0 %1263
    %v1266 = vmul.f32 %v1255, %v1264
    %1268 = vrot.lane.b32.xlu0 %v1266, 32
    %v1269 = vpop.permute.xlu0 %1268
    %v1271 = vadd.f32 %v1261, %v1269
    %v1272 = vtanh.pop %v1271
    %1274 = vrot.lane.b32.xlu0 %v1272, 64
    %v1275 = vpop.permute.xlu0 %1274
    %v1277 = vmul.f32 %v1255, %v1275
    %v1278 = vpack.c.bf16 %v1277, %v1277
    %1280 = vrot.lane.b32.xlu0 %v1278, 32
    %v1281 = vpop.permute.xlu0 %1280
    %v1283 = vsel %vm141, %v1281, 0
    %1285 = vmatprep.subr.bf16.mxu0 0
    %1286 = vmatpush1.bf16.msra.mxu0 %v892
    %1287 = vmatprep.subr.bf16.mxu0 0
    %1288 = vmatpush1.bf16.msra.mxu0 %v893
    %1289 = vmatprep.subr.bf16.mxu0 0
    %1290 = vmatpush1.bf16.msra.mxu0 0
    %1291 = vmatprep.subr.bf16.mxu0 0
    %1292 = vmatpush1.bf16.msra.mxu0 0
    %1293 = vmatprep.subr.bf16.mxu0 0
    %1294 = vmatpush1.bf16.msra.mxu0 0
    %1295 = vmatprep.subr.bf16.mxu0 0
    %1296 = vmatpush1.bf16.msra.mxu0 0
    %1297 = vmatprep.subr.bf16.mxu0 0
    %1298 = vmatpush1.bf16.msra.mxu0 0
    %1299 = vmatprep.subr.bf16.mxu0 0
    %1300 = vmatpush1.bf16.msra.mxu0 0
    %1301 = vmatprep.subr.bf16.mxu0 0
    %1302 = vmatpush1.bf16.msra.mxu0 0
    %1303 = vmatprep.subr.bf16.mxu0 0
    %1304 = vmatpush1.bf16.msra.mxu0 0
    %1305 = vmatprep.subr.bf16.mxu0 0
    %1306 = vmatpush1.bf16.msra.mxu0 0
    %1307 = vmatprep.subr.bf16.mxu0 0
    %1308 = vmatpush1.bf16.msra.mxu0 0
    %1309 = vmatprep.subr.bf16.mxu0 0
    %1310 = vmatpush1.bf16.msra.mxu0 0
    %1311 = vmatprep.subr.bf16.mxu0 0
    %1312 = vmatpush1.bf16.msra.mxu0 0
    %1313 = vmatprep.subr.bf16.mxu0 0
    %1314 = vmatpush1.bf16.msra.mxu0 0
    %1315 = vmatprep.subr.bf16.mxu0 0
    %1316 = vmatpush1.bf16.msra.mxu0 0
    %1317 = vmatprep.mubr.bf16.mxu0 0
    %1318 = vmatmul.mubr.bf16.gmra.mrb[0].mxu0 %v1283
    %v1319 = vpop.f32.mrb[0].mxu0
    %v1320 = vadd.f32 0.0, %v1319
    %v1321 = vpop.f32.mrb[0].mxu0
    %v1322 = vpop.f32.mrb[0].mxu0
    %v1323 = vpop.f32.mrb[0].mxu0
    %1324 = vdwg.mxu0
    %v1326 = vrot.slane %v1320, 6
    %v1328 = vadd.f32 %v881, %v1326
    %v1329 = vxor.u32 %v1328, 2147483648
    %v1330 = vmul.f32 %v1329, 1.442695
    %v1331 = vpow.pop %v1330
    %v1332 = vadd.f32 %v1331, 1.0
    %v1333 = vrcp.pop %v1332
    %v1334 = vmul.f32 1.0, %v1333
    %v1335 = vmul.f32 %v1334, 2.0
    %v1336 = vsub.f32 %v1335, 1.0
    %v1338 = vrot.slane %v1271, 6
    %v1340 = vmul.f32 %v1334, %v1338
    %1342 = vrot.lane.b32.xlu0 %v1336, 64
    %v1343 = vpop.permute.xlu0 %1342
    %v1345 = vmul.f32 %v1334, %v1343
    %1347 = vrot.lane.b32.xlu0 %v1345, 32
    %v1348 = vpop.permute.xlu0 %1347
    %v1350 = vadd.f32 %v1340, %v1348
    %v1351 = vtanh.pop %v1350
    %1353 = vrot.lane.b32.xlu0 %v1351, 64
    %v1354 = vpop.permute.xlu0 %1353
    %v1356 = vmul.f32 %v1334, %v1354
    %v1357 = vpack.c.bf16 %v1356, %v1356
    %v1359 = vrot.slane %v1357, 1
    %1360 = vrot.lane.b32.xlu0 %v1359, 32
    %v1361 = vpop.permute.xlu0 %1360
    %v1363 = vsel %vm141, %v1361, 0
    %1365 = vmatprep.subr.bf16.mxu0 0
    %1366 = vmatpush1.bf16.msra.mxu0 %v892
    %1367 = vmatprep.subr.bf16.mxu0 0
    %1368 = vmatpush1.bf16.msra.mxu0 %v893
    %1369 = vmatprep.subr.bf16.mxu0 0
    %1370 = vmatpush1.bf16.msra.mxu0 0
    %1371 = vmatprep.subr.bf16.mxu0 0
    %1372 = vmatpush1.bf16.msra.mxu0 0
    %1373 = vmatprep.subr.bf16.mxu0 0
    %1374 = vmatpush1.bf16.msra.mxu0 0
    %1375 = vmatprep.subr.bf16.mxu0 0
    %1376 = vmatpush1.bf16.msra.mxu0 0
    %1377 = vmatprep.subr.bf16.mxu0 0
    %1378 = vmatpush1.bf16.msra.mxu0 0
    %1379 = vmatprep.subr.bf16.mxu0 0
    %1380 = vmatpush1.bf16.msra.mxu0 0
    %1381 = vmatprep.subr.bf16.mxu0 0
    %1382 = vmatpush1.bf16.msra.mxu0 0
    %1383 = vmatprep.subr.bf16.mxu0 0
    %1384 = vmatpush1.bf16.msra.mxu0 0
    %1385 = vmatprep.subr.bf16.mxu0 0
    %1386 = vmatpush1.bf16.msra.mxu0 0
    %1387 = vmatprep.subr.bf16.mxu0 0
    %1388 = vmatpush1.bf16.msra.mxu0 0
    %1389 = vmatprep.subr.bf16.mxu0 0
    %1390 = vmatpush1.bf16.msra.mxu0 0
    %1391 = vmatprep.subr.bf16.mxu0 0
    %1392 = vmatpush1.bf16.msra.mxu0 0
    %1393 = vmatprep.subr.bf16.mxu0 0
    %1394 = vmatpush1.bf16.msra.mxu0 0
    %1395 = vmatprep.subr.bf16.mxu0 0
    %1396 = vmatpush1.bf16.msra.mxu0 0
    %1397 = vmatprep.mubr.bf16.mxu0 0
    %1398 = vmatmul.mubr.bf16.gmra.mrb[0].mxu0 %v1363
    %v1399 = vpop.f32.mrb[0].mxu0
    %v1400 = vadd.f32 0.0, %v1399
    %v1401 = vpop.f32.mrb[0].mxu0
    %v1402 = vpop.f32.mrb[0].mxu0
    %v1403 = vpop.f32.mrb[0].mxu0
    %1404 = vdwg.mxu0
    %v1406 = vrot.slane %v1400, 4
    %v1408 = vadd.f32 %v881, %v1406
    %v1409 = vxor.u32 %v1408, 2147483648
    %v1410 = vmul.f32 %v1409, 1.442695
    %v1411 = vpow.pop %v1410
    %v1412 = vadd.f32 %v1411, 1.0
    %v1413 = vrcp.pop %v1412
    %v1414 = vmul.f32 1.0, %v1413
    %v1415 = vmul.f32 %v1414, 2.0
    %v1416 = vsub.f32 %v1415, 1.0
    %v1418 = vrot.slane %v1350, 6
    %v1420 = vmul.f32 %v1414, %v1418
    %1422 = vrot.lane.b32.xlu0 %v1416, 64
    %v1423 = vpop.permute.xlu0 %1422
    %v1425 = vmul.f32 %v1414, %v1423
    %1427 = vrot.lane.b32.xlu0 %v1425, 32
    %v1428 = vpop.permute.xlu0 %1427
    %v1430 = vadd.f32 %v1420, %v1428
    %v1431 = vtanh.pop %v1430
    %1433 = vrot.lane.b32.xlu0 %v1431, 64
    %v1434 = vpop.permute.xlu0 %1433
    %v1436 = vmul.f32 %v1414, %v1434
    %v1437 = vpack.c.bf16 %v1436, %v1436
    %v1439 = vrot.slane %v1437, 2
    %1440 = vrot.lane.b32.xlu0 %v1439, 32
    %v1441 = vpop.permute.xlu0 %1440
    %v1443 = vsel %vm141, %v1441, 0
    %1445 = vmatprep.subr.bf16.mxu0 0
    %1446 = vmatpush1.bf16.msra.mxu0 %v892
    %1447 = vmatprep.subr.bf16.mxu0 0
    %1448 = vmatpush1.bf16.msra.mxu0 %v893
    %1449 = vmatprep.subr.bf16.mxu0 0
    %1450 = vmatpush1.bf16.msra.mxu0 0
    %1451 = vmatprep.subr.bf16.mxu0 0
    %1452 = vmatpush1.bf16.msra.mxu0 0
    %1453 = vmatprep.subr.bf16.mxu0 0
    %1454 = vmatpush1.bf16.msra.mxu0 0
    %1455 = vmatprep.subr.bf16.mxu0 0
    %1456 = vmatpush1.bf16.msra.mxu0 0
    %1457 = vmatprep.subr.bf16.mxu0 0
    %1458 = vmatpush1.bf16.msra.mxu0 0
    %1459 = vmatprep.subr.bf16.mxu0 0
    %1460 = vmatpush1.bf16.msra.mxu0 0
    %1461 = vmatprep.subr.bf16.mxu0 0
    %1462 = vmatpush1.bf16.msra.mxu0 0
    %1463 = vmatprep.subr.bf16.mxu0 0
    %1464 = vmatpush1.bf16.msra.mxu0 0
    %1465 = vmatprep.subr.bf16.mxu0 0
    %1466 = vmatpush1.bf16.msra.mxu0 0
    %1467 = vmatprep.subr.bf16.mxu0 0
    %1468 = vmatpush1.bf16.msra.mxu0 0
    %1469 = vmatprep.subr.bf16.mxu0 0
    %1470 = vmatpush1.bf16.msra.mxu0 0
    %1471 = vmatprep.subr.bf16.mxu0 0
    %1472 = vmatpush1.bf16.msra.mxu0 0
    %1473 = vmatprep.subr.bf16.mxu0 0
    %1474 = vmatpush1.bf16.msra.mxu0 0
    %1475 = vmatprep.subr.bf16.mxu0 0
    %1476 = vmatpush1.bf16.msra.mxu0 0
    %1477 = vmatprep.mubr.bf16.mxu0 0
    %1478 = vmatmul.mubr.bf16.gmra.mrb[0].mxu0 %v1443
    %v1479 = vpop.f32.mrb[0].mxu0
    %v1480 = vadd.f32 0.0, %v1479
    %v1481 = vpop.f32.mrb[0].mxu0
    %v1482 = vpop.f32.mrb[0].mxu0
    %v1483 = vpop.f32.mrb[0].mxu0
    %1484 = vdwg.mxu0
    %v1486 = vrot.slane %v1480, 2
    %v1488 = vadd.f32 %v881, %v1486
    %v1489 = vxor.u32 %v1488, 2147483648
    %v1490 = vmul.f32 %v1489, 1.442695
    %v1491 = vpow.pop %v1490
    %v1492 = vadd.f32 %v1491, 1.0
    %v1493 = vrcp.pop %v1492
    %v1494 = vmul.f32 1.0, %v1493
    %v1495 = vmul.f32 %v1494, 2.0
    %v1496 = vsub.f32 %v1495, 1.0
    %v1498 = vrot.slane %v1430, 6
    %v1500 = vmul.f32 %v1494, %v1498
    %1502 = vrot.lane.b32.xlu0 %v1496, 64
    %v1503 = vpop.permute.xlu0 %1502
    %v1505 = vmul.f32 %v1494, %v1503
    %1507 = vrot.lane.b32.xlu0 %v1505, 32
    %v1508 = vpop.permute.xlu0 %1507
    %v1510 = vadd.f32 %v1500, %v1508
    %v1511 = vtanh.pop %v1510
    %1513 = vrot.lane.b32.xlu0 %v1511, 64
    %v1514 = vpop.permute.xlu0 %1513
    %v1516 = vmul.f32 %v1494, %v1514
    %v1517 = vld [vmem:[%s7] sm:$0x1]
    %v1519 = vlaneseq
    %v1520 = vshrl.u32 %v1519, 7
    %v1521 = vsub.s32 0, %v1520
    %v1522 = vrot.slane %v1517, %v1521
    %1523 = vrot.lane.b32.xlu0 %v1522, 96
    %v1524 = vpop.permute.xlu0 %1523
    %v1526 = vmul.f32 %v1516, %v1524
    %1528 = vrot.lane.b32.xlu0 %v1526, 32
    %v1529 = vpop.permute.xlu0 %1528
    %v1531 = vsel %vm472, %v1529, 0.0
    %1532 = vadd.xlane.f32.xlu0 %v1531
    %v1533 = vpop.xlane.xlu0 %1532
    %v1534 = vld [vmem:[#allocation3] sm:$0x1]
    %v1536 = vlaneseq
    %v1537 = vshrl.u32 %v1536, 7
    %v1538 = vsub.s32 0, %v1537
    %v1539 = vrot.slane %v1534, %v1538
    %v1541 = vadd.f32 %v1533, %v1539
    %vm1542 = vcmask 7174
    %1543 = vst.msk [vmem:[%s9 - $0x6] sm:$0xc0] %vm1542, %v1541
    // Predicated region
    $region46: #{lstm_forecaster_forward.1} parent=1 // pred_check
      _
    $region47: #{lstm_forecaster_forward.1} parent=1 // pred_check_branch
      %1545 = sbr.rel (0) target = $region49
    $region48: #{lstm_forecaster_forward.1} parent=1 // pred_region
      _
    $region49: #{lstm_forecaster_forward.1} parent=1 // pred_fallthru
      _
    // Predicated region
    $region50: #{lstm_forecaster_forward.1} parent=1 // pred_check
      _
    $region51: #{lstm_forecaster_forward.1} parent=1 // pred_check_branch
      %1547 = sbr.rel (0) target = $region53
    $region52: #{lstm_forecaster_forward.1} parent=1 // pred_region
      _
    $region53: #{lstm_forecaster_forward.1} parent=1 // pred_fallthru
      _
    %1548 = vsyncpa [#allocation5], 1
    %1549 = vsyncpa [#allocation7], 1

</llo_original>
